<compile_context>
chip_gen: v7x
topology: tpu7x:2x2x1
jax: 0.10.0
libtpu: 0.0.40
codegen_flags: <defaults>
</compile_context>

<pallas_src>
from functools import partial

import jax
import jax.numpy as jnp
from jax import lax
from jax.experimental import pallas as pl
from jax.experimental.pallas import tpu as pltpu


def _attn_kernel(x_ref, mask_ref, wq_ref, wk_ref, wv_ref, wp_ref, b_ref,
                 *out_refs, scale, emit_weights, group, head_dim):
    # x_ref:    (1, N, C)      activations (compute dtype; resident across hg)
    # mask_ref: (1, G, N, N)   mask block for this (batch, head-group)
    #                          (pre-scaled by `scale` when not emitting weights)
    # wq/wk/wv_ref: (HG, C, G*hd)  VMEM-resident projection weights
    # wp_ref:   (HG, G*hd, C)  VMEM-resident output-projection rows
    # b_ref:    (1, C)         proj bias, f32
    # out_refs: out_ref (1, N, C) f32, revisited across hg (in-place head sum),
    #           optionally w_ref (1, G, N, N) pre-softmax weights.
    if emit_weights:
        out_ref, w_ref = out_refs
    else:
        (out_ref,) = out_refs
        w_ref = None

    hg = pl.program_id(1)
    f32 = jnp.float32
    cd = x_ref.dtype               # MXU operand dtype (bf16 default, f32 optional)
    G, hd = group, head_dim
    _, N, C = x_ref.shape

    # Output block is resident across the head-group axis; seed with the bias.
    @pl.when(hg == 0)
    def _init():
        out_ref[0] = jnp.broadcast_to(b_ref[...], (N, C)).astype(out_ref.dtype)

    x2 = x_ref[0]                                                   # (N, C)

    # Group-wide Q/K/V projections: full-C contraction, G*hd output lanes.
    wq = wq_ref[hg]                                                 # (C, G*hd)
    wk = wk_ref[hg]
    wv = wv_ref[hg]
    q = jnp.dot(x2, wq, preferred_element_type=f32)                 # (N, G*hd)
    k = jnp.dot(x2, wk, preferred_element_type=f32)
    v = jnp.dot(x2, wv, preferred_element_type=f32)

    wp_g = wp_ref[hg]                                               # (G*hd, C)
    mask = mask_ref[0].astype(f32)                                  # (G, N, N)

    o_acc = None
    for gi in range(G):            # static unrolled loop, G is small (<= 4)
        lo, hi = gi * hd, (gi + 1) * hd
        q_h = q[:, lo:hi]                                           # (N, hd)
        k_h = k[:, lo:hi]
        v_h = v[:, lo:hi]

        # q @ k^T with contract-last-of-both (no explicit k transpose), f32 acc.
        raw = lax.dot_general(q_h.astype(cd), k_h.astype(cd),
                              (((1,), (1,)), ((), ())),
                              preferred_element_type=f32)           # (N, N)

        if emit_weights:
            w = raw * mask[gi]            # module's returned "weights"
            w_ref[0, gi] = w.astype(w_ref.dtype)
            s = w * scale
        else:
            s = raw * mask[gi]            # scale already folded into the mask

        # Numerically-stable softmax in f32; normalization deferred past p@v.
        s = s - jnp.max(s, axis=-1, keepdims=True)
        p = jnp.exp(s)                                              # (N, N)
        l = jnp.sum(p, axis=-1, keepdims=True)                      # (N, 1)

        ctx = jnp.dot(p.astype(cd), v_h.astype(cd),
                      preferred_element_type=f32)                   # (N, hd)
        ctx = ctx * pl.reciprocal(l, approx=False)

        part = jnp.dot(ctx.astype(cd), wp_g[lo:hi, :],
                       preferred_element_type=f32)                  # (N, C)
        o_acc = part if o_acc is None else o_acc + part

    out_ref[0] = (out_ref[0] + o_acc).astype(out_ref.dtype)


def _pick_group_size(num_heads, head_dim, requested=None):
    if requested is not None:
        if num_heads % requested != 0:
            raise ValueError("group_size must divide num_heads")
        return requested
    # Largest divisor of H that keeps G*hd <= 256 lanes (and G <= 4).
    cap = max(1, min(num_heads, 4, max(1, 256 // head_dim)))
    g = 1
    for cand in range(1, cap + 1):
        if num_heads % cand == 0:
            g = cand
    return g


def vit_attention(x, attn_mask, wqkv_t, wproj_t, bproj, num_heads, *,
                  return_weights=True, matmul_dtype=jnp.bfloat16,
                  weights_dtype=jnp.float32, group_size=None):
    B, N, C = x.shape
    H = num_heads
    assert C % H == 0
    hd = C // H
    scale = hd ** (-0.5)
    G = _pick_group_size(H, hd, group_size)
    HG = H // G
    Ghd = G * hd

    cd = jnp.dtype(matmul_dtype)

    # Head-group-major weight re-arrangement (done once, at trace time).
    wq = wqkv_t[:, 0 * C:1 * C].reshape(C, HG, Ghd).transpose(1, 0, 2)  # (HG,C,Ghd)
    wk = wqkv_t[:, 1 * C:2 * C].reshape(C, HG, Ghd).transpose(1, 0, 2)
    wv = wqkv_t[:, 2 * C:3 * C].reshape(C, HG, Ghd).transpose(1, 0, 2)
    wp = wproj_t.reshape(HG, Ghd, C)                                    # (HG,Ghd,C)
    b2 = jnp.asarray(bproj).reshape(1, C).astype(jnp.float32)

    xk = x.astype(cd)
    wq, wk, wv, wp = (w.astype(cd) for w in (wq, wk, wv, wp))

    mask = attn_mask.astype(jnp.float32)
    if not return_weights:
        mask = mask * scale           # fold softmax scale into the mask
    mask = mask.astype(cd)            # bf16 mask halves its HBM traffic

    kernel = partial(_attn_kernel, scale=scale, emit_weights=return_weights,
                     group=G, head_dim=hd)

    out_spec = pl.BlockSpec((1, N, C), lambda b, hg: (b, 0, 0))
    if return_weights:
        out_shape = (jax.ShapeDtypeStruct((B, N, C), jnp.float32),
                     jax.ShapeDtypeStruct((B, H, N, N), jnp.dtype(weights_dtype)))
        out_specs = (out_spec,
                     pl.BlockSpec((1, G, N, N), lambda b, hg: (b, hg, 0, 0)))
    else:
        out_shape = jax.ShapeDtypeStruct((B, N, C), jnp.float32)
        out_specs = out_spec

    in_specs = [
        pl.BlockSpec((1, N, C), lambda b, hg: (b, 0, 0)),           # x (resident over hg)
        pl.BlockSpec((1, G, N, N), lambda b, hg: (b, hg, 0, 0)),    # mask per (b, group)
        pl.BlockSpec((HG, C, Ghd), lambda b, hg: (0, 0, 0)),        # wq (VMEM-resident)
        pl.BlockSpec((HG, C, Ghd), lambda b, hg: (0, 0, 0)),        # wk (VMEM-resident)
        pl.BlockSpec((HG, C, Ghd), lambda b, hg: (0, 0, 0)),        # wv (VMEM-resident)
        pl.BlockSpec((HG, Ghd, C), lambda b, hg: (0, 0, 0)),        # wproj (VMEM-resident)
        pl.BlockSpec((1, C), lambda b, hg: (0, 0)),                 # bias
    ]

    # Explicit VMEM budget (resident weights + double-buffered streaming blocks).
    est = (4 * C * C * cd.itemsize          # wq/wk/wv/wp resident
           + 2 * N * C * cd.itemsize        # x
           + 2 * G * N * N * cd.itemsize    # mask
           + N * C * 4 + C * 4)             # out block (f32) + bias
    if return_weights:
        est += 2 * G * N * N * jnp.dtype(weights_dtype).itemsize
    vmem_limit = int(min(max(2 * est, 16 * 2 ** 20), 64 * 2 ** 20))

    return pl.pallas_call(
        kernel,
        out_shape=out_shape,
        grid=(B, HG),
        in_specs=in_specs,
        out_specs=out_specs,
        compiler_params=pltpu.CompilerParams(
            dimension_semantics=("parallel", "arbitrary"),
            vmem_limit_bytes=vmem_limit),
    )(xk, mask, wq, wk, wv, wp, b2)


def _reference(x, attn_mask, wqkv_t, wproj_t, bproj, num_heads):
    # Pure-JAX mirror of the PyTorch forward, for correctness checking.
    B, N, C = x.shape
    H = num_heads
    hd = C // H
    scale = hd ** (-0.5)
    qkv = (x @ wqkv_t).reshape(B, N, 3, H, hd).transpose(2, 0, 3, 1, 4)
    q, k, v = qkv[0], qkv[1], qkv[2]                      # (B, H, N, hd)
    attn = jnp.einsum('bhqd,bhkd->bhqk', q, k) * scale
    attn = attn * attn_mask
    weights = attn / scale
    attn = jax.nn.softmax(attn, axis=-1)
    o = jnp.einsum('bhqk,bhkd->bhqd', attn, v).transpose(0, 2, 1, 3).reshape(B, N, C)
    return o @ wproj_t + jnp.asarray(bproj).reshape(1, C), weights


if __name__ == "__main__":
    B, N, C, H = 2, 8, 32, 8   # dim=32, num_heads=8 -> head_dim=4

    key = jax.random.PRNGKey(0)
    kx, km, k1, k2, k3 = jax.random.split(key, 5)

    x = jax.random.normal(kx, (B, N, C), dtype=jnp.float32)
    attn_mask = (jax.random.uniform(km, (B, H, N, N)) > 0.2).astype(jnp.float32)

    # nn.Linear(dim, 3*dim, bias=False): weight (3C, C); pass transposed (C, 3C)
    wqkv_t = jax.random.normal(k1, (C, 3 * C), dtype=jnp.float32) * 0.05
    # nn.Linear(dim, dim): weight (C, C) + bias (C,)
    wproj_t = jax.random.normal(k2, (C, C), dtype=jnp.float32) * 0.05
    bproj = jax.random.normal(k3, (1, C), dtype=jnp.float32) * 0.05

    ref_out, ref_w = _reference(x, attn_mask, wqkv_t, wproj_t, bproj, H)

    # Exact f32 path (matches the PyTorch module numerics).
    out, weights = vit_attention(x, attn_mask, wqkv_t, wproj_t, bproj, H,
                                 matmul_dtype=jnp.float32)
    out = jax.block_until_ready(out)
    weights = jax.block_until_ready(weights)
    assert jnp.allclose(out, ref_out, atol=1e-4, rtol=1e-4)
    assert jnp.allclose(weights, ref_w, atol=1e-4, rtol=1e-4)

    # Default path: bf16 MXU operands (v5e/v6e/v7x MXU-native), f32 softmax/acc.
    out_bf, w_bf = vit_attention(x, attn_mask, wqkv_t, wproj_t, bproj, H)
    out_bf = jax.block_until_ready(out_bf)
    w_bf = jax.block_until_ready(w_bf)
    assert jnp.allclose(out_bf, ref_out, atol=5e-2, rtol=5e-2)
    assert jnp.allclose(w_bf, ref_w, atol=5e-2, rtol=5e-2)

    # No-weights path (skips the (B,H,N,N) HBM writeback; scale folded in mask).
    out_nw = vit_attention(x, attn_mask, wqkv_t, wproj_t, bproj, H,
                           return_weights=False, matmul_dtype=jnp.float32)
    out_nw = jax.block_until_ready(out_nw)
    assert jnp.allclose(out_nw, ref_out, atol=1e-4, rtol=1e-4)

    print("KERNEL_OK")
</pallas_src>

<mosaic_0001>
module attributes {stable_mosaic.version = 11 : i64} {
  func.func @_attn_kernel(%arg0: i32, %arg1: i32, %arg2: memref<1x8x32xf32, #tpu.memory_space<vmem>>, %arg3: memref<1x4x8x8xf32, #tpu.memory_space<vmem>>, %arg4: memref<2x32x16xf32, #tpu.memory_space<vmem>>, %arg5: memref<2x32x16xf32, #tpu.memory_space<vmem>>, %arg6: memref<2x32x16xf32, #tpu.memory_space<vmem>>, %arg7: memref<2x16x32xf32, #tpu.memory_space<vmem>>, %arg8: memref<1x32xf32, #tpu.memory_space<vmem>>, %arg9: memref<1x8x32xf32, #tpu.memory_space<vmem>>, %arg10: memref<1x4x8x8xf32, #tpu.memory_space<vmem>>) attributes {dimension_semantics = [#tpu.dimension_semantics<parallel>, #tpu.dimension_semantics<arbitrary>], iteration_bounds = array<i64: 2, 2>, scalar_prefetch = 0 : i64, scratch_operands = 0 : i64, tpu.core_type = #tpu.core_type<tc>, window_params = [{transform_indices = @transform_0, window_bounds = array<i64: 1, 8, 32>}, {transform_indices = @transform_1, window_bounds = array<i64: 1, 4, 8, 8>}, {pipeline_mode = #tpu.pipeline_mode<synchronous>, transform_indices = @transform_2, window_bounds = array<i64: 2, 32, 16>}, {pipeline_mode = #tpu.pipeline_mode<synchronous>, transform_indices = @transform_3, window_bounds = array<i64: 2, 32, 16>}, {pipeline_mode = #tpu.pipeline_mode<synchronous>, transform_indices = @transform_4, window_bounds = array<i64: 2, 32, 16>}, {pipeline_mode = #tpu.pipeline_mode<synchronous>, transform_indices = @transform_5, window_bounds = array<i64: 2, 16, 32>}, {pipeline_mode = #tpu.pipeline_mode<synchronous>, transform_indices = @transform_6, window_bounds = array<i64: 1, 32>}, {transform_indices = @transform_7, window_bounds = array<i64: 1, 8, 32>}, {transform_indices = @transform_8, window_bounds = array<i64: 1, 4, 8, 8>}]} {
    %c0_i32 = arith.constant 0 : i32
    %0 = arith.cmpi eq, %arg1, %c0_i32 : i32
    %1 = arith.extui %0 : i1 to i32
    %c0_i32_0 = arith.constant 0 : i32
    %2 = arith.cmpi ne, %1, %c0_i32_0 : i32
    scf.if %2 {
      %c0_60 = arith.constant 0 : index
      %c0_61 = arith.constant 0 : index
      %131 = vector.load %arg8[%c0_60, %c0_61] : memref<1x32xf32, #tpu.memory_space<vmem>>, vector<1x32xf32>
      %132 = vector.shape_cast %131 : vector<1x32xf32> to vector<1x32xf32>
      %133 = vector.broadcast %132 : vector<1x32xf32> to vector<8x32xf32>
      %c0_62 = arith.constant 0 : index
      %c0_63 = arith.constant 0 : index
      %c0_64 = arith.constant 0 : index
      %134 = vector.load %arg9[%c0_62, %c0_63, %c0_64] : memref<1x8x32xf32, #tpu.memory_space<vmem>>, vector<1x8x32xf32>
      %135 = vector.shape_cast %134 : vector<1x8x32xf32> to vector<8x32xf32>
      %136 = vector.shape_cast %133 : vector<8x32xf32> to vector<1x8x32xf32>
      tpu.vector_store %arg9[%c0_62, %c0_63, %c0_64], %136 {strides = array<i32>} : memref<1x8x32xf32, #tpu.memory_space<vmem>>, vector<1x8x32xf32>,
    } else {
    }
    %c0 = arith.constant 0 : index
    %c0_1 = arith.constant 0 : index
    %c0_2 = arith.constant 0 : index
    %3 = vector.load %arg2[%c0, %c0_1, %c0_2] : memref<1x8x32xf32, #tpu.memory_space<vmem>>, vector<1x8x32xf32>
    %4 = vector.shape_cast %3 : vector<1x8x32xf32> to vector<8x32xf32>
    %5 = arith.index_cast %arg1 : i32 to index
    %c0_3 = arith.constant 0 : index
    %c0_4 = arith.constant 0 : index
    %6 = vector.load %arg4[%5, %c0_3, %c0_4] : memref<2x32x16xf32, #tpu.memory_space<vmem>>, vector<1x32x16xf32>
    %7 = vector.shape_cast %6 : vector<1x32x16xf32> to vector<32x16xf32>
    %8 = arith.index_cast %arg1 : i32 to index
    %c0_5 = arith.constant 0 : index
    %c0_6 = arith.constant 0 : index
    %9 = vector.load %arg5[%8, %c0_5, %c0_6] : memref<2x32x16xf32, #tpu.memory_space<vmem>>, vector<1x32x16xf32>
    %10 = vector.shape_cast %9 : vector<1x32x16xf32> to vector<32x16xf32>
    %11 = arith.index_cast %arg1 : i32 to index
    %c0_7 = arith.constant 0 : index
    %c0_8 = arith.constant 0 : index
    %12 = vector.load %arg6[%11, %c0_7, %c0_8] : memref<2x32x16xf32, #tpu.memory_space<vmem>>, vector<1x32x16xf32>
    %13 = vector.shape_cast %12 : vector<1x32x16xf32> to vector<32x16xf32>
    %cst = arith.constant dense<0.000000e+00> : vector<8x16xf32>
    %14 = tpu.matmul %4, %7, %cst {dimension_numbers = #tpu.dot_dimension_numbers<[1], [0], [0], [1], [0, 0, 1, 1], [], []>} : vector<8x32xf32>, vector<32x16xf32>, vector<8x16xf32> -> vector<8x16xf32>
    %cst_9 = arith.constant dense<0.000000e+00> : vector<8x16xf32>
    %15 = tpu.matmul %4, %10, %cst_9 {dimension_numbers = #tpu.dot_dimension_numbers<[1], [0], [0], [1], [0, 0, 1, 1], [], []>} : vector<8x32xf32>, vector<32x16xf32>, vector<8x16xf32> -> vector<8x16xf32>
    %cst_10 = arith.constant dense<0.000000e+00> : vector<8x16xf32>
    %16 = tpu.matmul %4, %13, %cst_10 {dimension_numbers = #tpu.dot_dimension_numbers<[1], [0], [0], [1], [0, 0, 1, 1], [], []>} : vector<8x32xf32>, vector<32x16xf32>, vector<8x16xf32> -> vector<8x16xf32>
    %17 = arith.index_cast %arg1 : i32 to index
    %c0_11 = arith.constant 0 : index
    %c0_12 = arith.constant 0 : index
    %18 = vector.load %arg7[%17, %c0_11, %c0_12] : memref<2x16x32xf32, #tpu.memory_space<vmem>>, vector<1x16x32xf32>
    %19 = vector.shape_cast %18 : vector<1x16x32xf32> to vector<16x32xf32>
    %c0_13 = arith.constant 0 : index
    %c0_14 = arith.constant 0 : index
    %c0_15 = arith.constant 0 : index
    %c0_16 = arith.constant 0 : index
    %20 = vector.load %arg3[%c0_13, %c0_14, %c0_15, %c0_16] : memref<1x4x8x8xf32, #tpu.memory_space<vmem>>, vector<1x4x8x8xf32>
    %21 = vector.shape_cast %20 : vector<1x4x8x8xf32> to vector<4x8x8xf32>
    %22 = vector.extract_strided_slice %14 {offsets = [0, 0], sizes = [8, 4], strides = [1, 1]} : vector<8x16xf32> to vector<8x4xf32>
    %23 = vector.extract_strided_slice %15 {offsets = [0, 0], sizes = [8, 4], strides = [1, 1]} : vector<8x16xf32> to vector<8x4xf32>
    %24 = vector.extract_strided_slice %16 {offsets = [0, 0], sizes = [8, 4], strides = [1, 1]} : vector<8x16xf32> to vector<8x4xf32>
    %cst_17 = arith.constant dense<0.000000e+00> : vector<8x8xf32>
    %25 = tpu.matmul %22, %23, %cst_17 {dimension_numbers = #tpu.dot_dimension_numbers<[1], [1], [0], [0], [0, 0, 1, 0], [], []>} : vector<8x4xf32>, vector<8x4xf32>, vector<8x8xf32> -> vector<8x8xf32>
    %26 = vector.extract_strided_slice %21 {offsets = [0, 0, 0], sizes = [1, 8, 8], strides = [1, 1, 1]} : vector<4x8x8xf32> to vector<1x8x8xf32>
    %27 = vector.shape_cast %26 : vector<1x8x8xf32> to vector<8x8xf32>
    %28 = arith.mulf %25, %27 : vector<8x8xf32>
    %c0_18 = arith.constant 0 : index
    %c0_19 = arith.constant 0 : index
    %c0_20 = arith.constant 0 : index
    %c0_21 = arith.constant 0 : index
    %29 = vector.load %arg10[%c0_18, %c0_19, %c0_20, %c0_21] : memref<1x4x8x8xf32, #tpu.memory_space<vmem>>, vector<1x1x8x8xf32>
    %30 = vector.shape_cast %29 : vector<1x1x8x8xf32> to vector<8x8xf32>
    %31 = vector.shape_cast %28 : vector<8x8xf32> to vector<1x1x8x8xf32>
    tpu.vector_store %arg10[%c0_18, %c0_19, %c0_20, %c0_21], %31 {strides = array<i32>} : memref<1x4x8x8xf32, #tpu.memory_space<vmem>>, vector<1x1x8x8xf32>,
    %cst_22 = arith.constant 5.000000e-01 : f32
    %32 = vector.broadcast %cst_22 : f32 to vector<8x8xf32>
    %33 = arith.mulf %28, %32 : vector<8x8xf32>
    %cst_23 = arith.constant dense<0xFF800000> : vector<8xf32>
    %34 = vector.multi_reduction <maximumf>, %33, %cst_23 [1] : vector<8x8xf32> to vector<8xf32>
    %35 = vector.shape_cast %34 : vector<8xf32> to vector<8x1xf32>
    %36 = vector.broadcast %35 : vector<8x1xf32> to vector<8x8xf32>
    %37 = arith.subf %33, %36 : vector<8x8xf32>
    %38 = math.exp %37 : vector<8x8xf32>
    %cst_24 = arith.constant dense<0.000000e+00> : vector<8xf32>
    %39 = vector.multi_reduction <add>, %38, %cst_24 [1] : vector<8x8xf32> to vector<8xf32>
    %40 = vector.shape_cast %39 : vector<8xf32> to vector<8x1xf32>
    %cst_25 = arith.constant dense<0.000000e+00> : vector<8x4xf32>
    %41 = tpu.matmul %38, %24, %cst_25 {dimension_numbers = #tpu.dot_dimension_numbers<[1], [0], [0], [1], [0, 0, 1, 1], [], []>} : vector<8x8xf32>, vector<8x4xf32>, vector<8x4xf32> -> vector<8x4xf32>
    %42 = tpu.reciprocal %40 : vector<8x1xf32> -> vector<8x1xf32>
    %43 = vector.broadcast %42 : vector<8x1xf32> to vector<8x4xf32>
    %44 = arith.mulf %41, %43 : vector<8x4xf32>
    %45 = vector.extract_strided_slice %19 {offsets = [0, 0], sizes = [4, 32], strides = [1, 1]} : vector<16x32xf32> to vector<4x32xf32>
    %cst_26 = arith.constant dense<0.000000e+00> : vector<8x32xf32>
    %46 = tpu.matmul %44, %45, %cst_26 {dimension_numbers = #tpu.dot_dimension_numbers<[1], [0], [0], [1], [0, 0, 1, 1], [], []>} : vector<8x4xf32>, vector<4x32xf32>, vector<8x32xf32> -> vector<8x32xf32>
    %47 = vector.extract_strided_slice %14 {offsets = [0, 4], sizes = [8, 4], strides = [1, 1]} : vector<8x16xf32> to vector<8x4xf32>
    %48 = vector.extract_strided_slice %15 {offsets = [0, 4], sizes = [8, 4], strides = [1, 1]} : vector<8x16xf32> to vector<8x4xf32>
    %49 = vector.extract_strided_slice %16 {offsets = [0, 4], sizes = [8, 4], strides = [1, 1]} : vector<8x16xf32> to vector<8x4xf32>
    %cst_27 = arith.constant dense<0.000000e+00> : vector<8x8xf32>
    %50 = tpu.matmul %47, %48, %cst_27 {dimension_numbers = #tpu.dot_dimension_numbers<[1], [1], [0], [0], [0, 0, 1, 0], [], []>} : vector<8x4xf32>, vector<8x4xf32>, vector<8x8xf32> -> vector<8x8xf32>
    %51 = vector.extract_strided_slice %21 {offsets = [1, 0, 0], sizes = [1, 8, 8], strides = [1, 1, 1]} : vector<4x8x8xf32> to vector<1x8x8xf32>
    %52 = vector.shape_cast %51 : vector<1x8x8xf32> to vector<8x8xf32>
    %53 = arith.mulf %50, %52 : vector<8x8xf32>
    %c0_28 = arith.constant 0 : index
    %c1 = arith.constant 1 : index
    %c0_29 = arith.constant 0 : index
    %c0_30 = arith.constant 0 : index
    %54 = vector.load %arg10[%c0_28, %c1, %c0_29, %c0_30] : memref<1x4x8x8xf32, #tpu.memory_space<vmem>>, vector<1x1x8x8xf32>
    %55 = vector.shape_cast %54 : vector<1x1x8x8xf32> to vector<8x8xf32>
    %56 = vector.shape_cast %53 : vector<8x8xf32> to vector<1x1x8x8xf32>
    tpu.vector_store %arg10[%c0_28, %c1, %c0_29, %c0_30], %56 {strides = array<i32>} : memref<1x4x8x8xf32, #tpu.memory_space<vmem>>, vector<1x1x8x8xf32>,
    %cst_31 = arith.constant 5.000000e-01 : f32
    %57 = vector.broadcast %cst_31 : f32 to vector<8x8xf32>
    %58 = arith.mulf %53, %57 : vector<8x8xf32>
    %cst_32 = arith.constant dense<0xFF800000> : vector<8xf32>
    %59 = vector.multi_reduction <maximumf>, %58, %cst_32 [1] : vector<8x8xf32> to vector<8xf32>
    %60 = vector.shape_cast %59 : vector<8xf32> to vector<8x1xf32>
    %61 = vector.broadcast %60 : vector<8x1xf32> to vector<8x8xf32>
    %62 = arith.subf %58, %61 : vector<8x8xf32>
    %63 = math.exp %62 : vector<8x8xf32>
    %cst_33 = arith.constant dense<0.000000e+00> : vector<8xf32>
    %64 = vector.multi_reduction <add>, %63, %cst_33 [1] : vector<8x8xf32> to vector<8xf32>
    %65 = vector.shape_cast %64 : vector<8xf32> to vector<8x1xf32>
    %cst_34 = arith.constant dense<0.000000e+00> : vector<8x4xf32>
    %66 = tpu.matmul %63, %49, %cst_34 {dimension_numbers = #tpu.dot_dimension_numbers<[1], [0], [0], [1], [0, 0, 1, 1], [], []>} : vector<8x8xf32>, vector<8x4xf32>, vector<8x4xf32> -> vector<8x4xf32>
    %67 = tpu.reciprocal %65 : vector<8x1xf32> -> vector<8x1xf32>
    %68 = vector.broadcast %67 : vector<8x1xf32> to vector<8x4xf32>
    %69 = arith.mulf %66, %68 : vector<8x4xf32>
    %70 = vector.extract_strided_slice %19 {offsets = [4, 0], sizes = [4, 32], strides = [1, 1]} : vector<16x32xf32> to vector<4x32xf32>
    %cst_35 = arith.constant dense<0.000000e+00> : vector<8x32xf32>
    %71 = tpu.matmul %69, %70, %cst_35 {dimension_numbers = #tpu.dot_dimension_numbers<[1], [0], [0], [1], [0, 0, 1, 1], [], []>} : vector<8x4xf32>, vector<4x32xf32>, vector<8x32xf32> -> vector<8x32xf32>
    %72 = arith.addf %46, %71 : vector<8x32xf32>
    %73 = vector.extract_strided_slice %14 {offsets = [0, 8], sizes = [8, 4], strides = [1, 1]} : vector<8x16xf32> to vector<8x4xf32>
    %74 = vector.extract_strided_slice %15 {offsets = [0, 8], sizes = [8, 4], strides = [1, 1]} : vector<8x16xf32> to vector<8x4xf32>
    %75 = vector.extract_strided_slice %16 {offsets = [0, 8], sizes = [8, 4], strides = [1, 1]} : vector<8x16xf32> to vector<8x4xf32>
    %cst_36 = arith.constant dense<0.000000e+00> : vector<8x8xf32>
    %76 = tpu.matmul %73, %74, %cst_36 {dimension_numbers = #tpu.dot_dimension_numbers<[1], [1], [0], [0], [0, 0, 1, 0], [], []>} : vector<8x4xf32>, vector<8x4xf32>, vector<8x8xf32> -> vector<8x8xf32>
    %77 = vector.extract_strided_slice %21 {offsets = [2, 0, 0], sizes = [1, 8, 8], strides = [1, 1, 1]} : vector<4x8x8xf32> to vector<1x8x8xf32>
    %78 = vector.shape_cast %77 : vector<1x8x8xf32> to vector<8x8xf32>
    %79 = arith.mulf %76, %78 : vector<8x8xf32>
    %c0_37 = arith.constant 0 : index
    %c2 = arith.constant 2 : index
    %c0_38 = arith.constant 0 : index
    %c0_39 = arith.constant 0 : index
    %80 = vector.load %arg10[%c0_37, %c2, %c0_38, %c0_39] : memref<1x4x8x8xf32, #tpu.memory_space<vmem>>, vector<1x1x8x8xf32>
    %81 = vector.shape_cast %80 : vector<1x1x8x8xf32> to vector<8x8xf32>
    %82 = vector.shape_cast %79 : vector<8x8xf32> to vector<1x1x8x8xf32>
    tpu.vector_store %arg10[%c0_37, %c2, %c0_38, %c0_39], %82 {strides = array<i32>} : memref<1x4x8x8xf32, #tpu.memory_space<vmem>>, vector<1x1x8x8xf32>,
    %cst_40 = arith.constant 5.000000e-01 : f32
    %83 = vector.broadcast %cst_40 : f32 to vector<8x8xf32>
    %84 = arith.mulf %79, %83 : vector<8x8xf32>
    %cst_41 = arith.constant dense<0xFF800000> : vector<8xf32>
    %85 = vector.multi_reduction <maximumf>, %84, %cst_41 [1] : vector<8x8xf32> to vector<8xf32>
    %86 = vector.shape_cast %85 : vector<8xf32> to vector<8x1xf32>
    %87 = vector.broadcast %86 : vector<8x1xf32> to vector<8x8xf32>
    %88 = arith.subf %84, %87 : vector<8x8xf32>
    %89 = math.exp %88 : vector<8x8xf32>
    %cst_42 = arith.constant dense<0.000000e+00> : vector<8xf32>
    %90 = vector.multi_reduction <add>, %89, %cst_42 [1] : vector<8x8xf32> to vector<8xf32>
    %91 = vector.shape_cast %90 : vector<8xf32> to vector<8x1xf32>
    %cst_43 = arith.constant dense<0.000000e+00> : vector<8x4xf32>
    %92 = tpu.matmul %89, %75, %cst_43 {dimension_numbers = #tpu.dot_dimension_numbers<[1], [0], [0], [1], [0, 0, 1, 1], [], []>} : vector<8x8xf32>, vector<8x4xf32>, vector<8x4xf32> -> vector<8x4xf32>
    %93 = tpu.reciprocal %91 : vector<8x1xf32> -> vector<8x1xf32>
    %94 = vector.broadcast %93 : vector<8x1xf32> to vector<8x4xf32>
    %95 = arith.mulf %92, %94 : vector<8x4xf32>
    %96 = vector.extract_strided_slice %19 {offsets = [8, 0], sizes = [4, 32], strides = [1, 1]} : vector<16x32xf32> to vector<4x32xf32>
    %cst_44 = arith.constant dense<0.000000e+00> : vector<8x32xf32>
    %97 = tpu.matmul %95, %96, %cst_44 {dimension_numbers = #tpu.dot_dimension_numbers<[1], [0], [0], [1], [0, 0, 1, 1], [], []>} : vector<8x4xf32>, vector<4x32xf32>, vector<8x32xf32> -> vector<8x32xf32>
    %98 = arith.addf %72, %97 : vector<8x32xf32>
    %99 = vector.extract_strided_slice %14 {offsets = [0, 12], sizes = [8, 4], strides = [1, 1]} : vector<8x16xf32> to vector<8x4xf32>
    %100 = vector.extract_strided_slice %15 {offsets = [0, 12], sizes = [8, 4], strides = [1, 1]} : vector<8x16xf32> to vector<8x4xf32>
    %101 = vector.extract_strided_slice %16 {offsets = [0, 12], sizes = [8, 4], strides = [1, 1]} : vector<8x16xf32> to vector<8x4xf32>
    %cst_45 = arith.constant dense<0.000000e+00> : vector<8x8xf32>
    %102 = tpu.matmul %99, %100, %cst_45 {dimension_numbers = #tpu.dot_dimension_numbers<[1], [1], [0], [0], [0, 0, 1, 0], [], []>} : vector<8x4xf32>, vector<8x4xf32>, vector<8x8xf32> -> vector<8x8xf32>
    %103 = vector.extract_strided_slice %21 {offsets = [3, 0, 0], sizes = [1, 8, 8], strides = [1, 1, 1]} : vector<4x8x8xf32> to vector<1x8x8xf32>
    %104 = vector.shape_cast %103 : vector<1x8x8xf32> to vector<8x8xf32>
    %105 = arith.mulf %102, %104 : vector<8x8xf32>
    %c0_46 = arith.constant 0 : index
    %c3 = arith.constant 3 : index
    %c0_47 = arith.constant 0 : index
    %c0_48 = arith.constant 0 : index
    %106 = vector.load %arg10[%c0_46, %c3, %c0_47, %c0_48] : memref<1x4x8x8xf32, #tpu.memory_space<vmem>>, vector<1x1x8x8xf32>
    %107 = vector.shape_cast %106 : vector<1x1x8x8xf32> to vector<8x8xf32>
    %108 = vector.shape_cast %105 : vector<8x8xf32> to vector<1x1x8x8xf32>
    tpu.vector_store %arg10[%c0_46, %c3, %c0_47, %c0_48], %108 {strides = array<i32>} : memref<1x4x8x8xf32, #tpu.memory_space<vmem>>, vector<1x1x8x8xf32>,
    %cst_49 = arith.constant 5.000000e-01 : f32
    %109 = vector.broadcast %cst_49 : f32 to vector<8x8xf32>
    %110 = arith.mulf %105, %109 : vector<8x8xf32>
    %cst_50 = arith.constant dense<0xFF800000> : vector<8xf32>
    %111 = vector.multi_reduction <maximumf>, %110, %cst_50 [1] : vector<8x8xf32> to vector<8xf32>
    %112 = vector.shape_cast %111 : vector<8xf32> to vector<8x1xf32>
    %113 = vector.broadcast %112 : vector<8x1xf32> to vector<8x8xf32>
    %114 = arith.subf %110, %113 : vector<8x8xf32>
    %115 = math.exp %114 : vector<8x8xf32>
    %cst_51 = arith.constant dense<0.000000e+00> : vector<8xf32>
    %116 = vector.multi_reduction <add>, %115, %cst_51 [1] : vector<8x8xf32> to vector<8xf32>
    %117 = vector.shape_cast %116 : vector<8xf32> to vector<8x1xf32>
    %cst_52 = arith.constant dense<0.000000e+00> : vector<8x4xf32>
    %118 = tpu.matmul %115, %101, %cst_52 {dimension_numbers = #tpu.dot_dimension_numbers<[1], [0], [0], [1], [0, 0, 1, 1], [], []>} : vector<8x8xf32>, vector<8x4xf32>, vector<8x4xf32> -> vector<8x4xf32>
    %119 = tpu.reciprocal %117 : vector<8x1xf32> -> vector<8x1xf32>
    %120 = vector.broadcast %119 : vector<8x1xf32> to vector<8x4xf32>
    %121 = arith.mulf %118, %120 : vector<8x4xf32>
    %122 = vector.extract_strided_slice %19 {offsets = [12, 0], sizes = [4, 32], strides = [1, 1]} : vector<16x32xf32> to vector<4x32xf32>
    %cst_53 = arith.constant dense<0.000000e+00> : vector<8x32xf32>
    %123 = tpu.matmul %121, %122, %cst_53 {dimension_numbers = #tpu.dot_dimension_numbers<[1], [0], [0], [1], [0, 0, 1, 1], [], []>} : vector<8x4xf32>, vector<4x32xf32>, vector<8x32xf32> -> vector<8x32xf32>
    %124 = arith.addf %98, %123 : vector<8x32xf32>
    %c0_54 = arith.constant 0 : index
    %c0_55 = arith.constant 0 : index
    %c0_56 = arith.constant 0 : index
    %125 = vector.load %arg9[%c0_54, %c0_55, %c0_56] : memref<1x8x32xf32, #tpu.memory_space<vmem>>, vector<1x8x32xf32>
    %126 = vector.shape_cast %125 : vector<1x8x32xf32> to vector<8x32xf32>
    %127 = arith.addf %126, %124 : vector<8x32xf32>
    %c0_57 = arith.constant 0 : index
    %c0_58 = arith.constant 0 : index
    %c0_59 = arith.constant 0 : index
    %128 = vector.load %arg9[%c0_57, %c0_58, %c0_59] : memref<1x8x32xf32, #tpu.memory_space<vmem>>, vector<1x8x32xf32>
    %129 = vector.shape_cast %128 : vector<1x8x32xf32> to vector<8x32xf32>
    %130 = vector.shape_cast %127 : vector<8x32xf32> to vector<1x8x32xf32>
    tpu.vector_store %arg9[%c0_57, %c0_58, %c0_59], %130 {strides = array<i32>} : memref<1x8x32xf32, #tpu.memory_space<vmem>>, vector<1x8x32xf32>,
    return
  }
  func.func @transform_0(%arg0: i32, %arg1: i32) -> (i32, i32, i32) {
    %c0_i32 = arith.constant 0 : i32
    %c0_i32_0 = arith.constant 0 : i32
    %c0_i32_1 = arith.constant 0 : i32
    return %arg0, %c0_i32, %c0_i32_0 : i32, i32, i32
  }
  func.func @transform_1(%arg0: i32, %arg1: i32) -> (i32, i32, i32, i32) {
    %c0_i32 = arith.constant 0 : i32
    %c0_i32_0 = arith.constant 0 : i32
    %c0_i32_1 = arith.constant 0 : i32
    return %arg0, %arg1, %c0_i32, %c0_i32_0 : i32, i32, i32, i32
  }
  func.func @transform_2(%arg0: i32, %arg1: i32) -> (i32, i32, i32) {
    %c0_i32 = arith.constant 0 : i32
    %c0_i32_0 = arith.constant 0 : i32
    %c0_i32_1 = arith.constant 0 : i32
    %c0_i32_2 = arith.constant 0 : i32
    return %c0_i32, %c0_i32_0, %c0_i32_1 : i32, i32, i32
  }
  func.func @transform_3(%arg0: i32, %arg1: i32) -> (i32, i32, i32) {
    %c0_i32 = arith.constant 0 : i32
    %c0_i32_0 = arith.constant 0 : i32
    %c0_i32_1 = arith.constant 0 : i32
    %c0_i32_2 = arith.constant 0 : i32
    return %c0_i32, %c0_i32_0, %c0_i32_1 : i32, i32, i32
  }
  func.func @transform_4(%arg0: i32, %arg1: i32) -> (i32, i32, i32) {
    %c0_i32 = arith.constant 0 : i32
    %c0_i32_0 = arith.constant 0 : i32
    %c0_i32_1 = arith.constant 0 : i32
    %c0_i32_2 = arith.constant 0 : i32
    return %c0_i32, %c0_i32_0, %c0_i32_1 : i32, i32, i32
  }
  func.func @transform_5(%arg0: i32, %arg1: i32) -> (i32, i32, i32) {
    %c0_i32 = arith.constant 0 : i32
    %c0_i32_0 = arith.constant 0 : i32
    %c0_i32_1 = arith.constant 0 : i32
    %c0_i32_2 = arith.constant 0 : i32
    return %c0_i32, %c0_i32_0, %c0_i32_1 : i32, i32, i32
  }
  func.func @transform_6(%arg0: i32, %arg1: i32) -> (i32, i32) {
    %c0_i32 = arith.constant 0 : i32
    %c0_i32_0 = arith.constant 0 : i32
    %c0_i32_1 = arith.constant 0 : i32
    return %c0_i32, %c0_i32_0 : i32, i32
  }
  func.func @transform_7(%arg0: i32, %arg1: i32) -> (i32, i32, i32) {
    %c0_i32 = arith.constant 0 : i32
    %c0_i32_0 = arith.constant 0 : i32
    %c0_i32_1 = arith.constant 0 : i32
    return %arg0, %c0_i32, %c0_i32_0 : i32, i32, i32
  }
  func.func @transform_8(%arg0: i32, %arg1: i32) -> (i32, i32, i32, i32) {
    %c0_i32 = arith.constant 0 : i32
    %c0_i32_0 = arith.constant 0 : i32
    %c0_i32_1 = arith.constant 0 : i32
    return %arg0, %arg1, %c0_i32, %c0_i32_0 : i32, i32, i32, i32
  }
}

</mosaic_0001>

<llo_original>
// kernel: tpu_custom_call.1
$region0: #{tpu_custom_call.1}
  #allocation0 [shape = 'u32[]', space=smem, size = 0x4, offset = 0x4, fixed_abs, tag = 'smem constant byte address 0x4 - core index']
  #allocation1 [shape = 'u32[144,128]{1,0:T(1,128)}', space=vmem, size = 0x12000, scoped, tag = 'internal scratch']
  %s0 = inlined_call_operand.vmem [shape: f32[2,8,32], index: 0, kind: input, shape index: {}]
  %s1 = inlined_call_operand.vmem [shape: f32[2,8,8,8], index: 1, kind: input, shape index: {}]
  %s2 = inlined_call_operand.vmem [shape: f32[2,32,16], index: 2, kind: input, shape index: {}]
  %s3 = inlined_call_operand.vmem [shape: f32[2,32,16], index: 3, kind: input, shape index: {}]
  %s4 = inlined_call_operand.vmem [shape: f32[2,32,16], index: 4, kind: input, shape index: {}]
  %s5 = inlined_call_operand.vmem [shape: f32[2,16,32], index: 5, kind: input, shape index: {}]
  %s6 = inlined_call_operand.vmem [shape: f32[1,32], index: 6, kind: input, shape index: {}]
  %s7 = inlined_call_operand.hbm [shape: f32[2,8,32], index: 7, kind: output, shape index: {0}]
  %s8 = inlined_call_operand.hbm [shape: f32[2,8,8,8], index: 8, kind: output, shape index: {1}]
  %9 = xla_tuple %s7, %s8
  %s10 = sld [smem:[#allocation0]]
  $region73: #{tpu_custom_call.1} parent=0
    _
  %s12 = ssub.s32 1, %s10
  %s13 = scalar_select 0, %s12, %s10
  $region1: #{tpu_custom_call.1} parent=0
    #allocation2 [shape = 'u8[8192]{0}', space=vmem, size = 0x2000, scoped, tag = 'output window, operand 0']
    #allocation3 [shape = 's32[2]{0}', space=sflag, size = 0x8, scoped, tag = 'scoped memory for tpu_custom_call.1']
    #allocation4 [shape = 'u8[32768]{0}', space=vmem, size = 0x8000, scoped, tag = 'output window, operand 1']
    #allocation5 [shape = 's32[2]{0}', space=sflag, size = 0x8, scoped, tag = 'scoped memory for tpu_custom_call.1']
    %14 = vsyncpa [#allocation3], 0
    %s15 = scalar_lea.sflag [#allocation3], 1
    %16 = vsyncpa %s15, 0
    %17 = vsyncpa [#allocation5], 0
    %s18 = scalar_lea.sflag [#allocation5], 1
    %19 = vsyncpa %s18, 0
    loop: start=0, step=1, limit=6
    $region2: #{tpu_custom_call.1} parent=1 // loop_pre_header
      _
    $region3: #{tpu_custom_call.1} parent=1 // loop_header
      %s21 = sphi 0, %s25
      %p22 = scmp.ge.s32.totalorder %s21, 6
      %s28 = sphi 0, %s40
      %s29 = sphi 0, %s36
      %s30 = sphi 0, %s28
      %s31 = sphi 0, %s29
      %s32 = sphi 0, %s30
      %s33 = sphi 0, %s31
      %s43 = sphi 0, %s45
      %s46 = sphi 0, %s43
      %s47 = sphi 0, %s46
      %s63 = sphi 0, %s47
      %s71 = sphi 0, %s73
      %s74 = sphi 0, %s71
      %s75 = sphi 0, %s74
      %s91 = sphi 0, %s75
      %s95 = sphi 0, %s95
      %s97 = sphi 0, %s95
      %s98 = sphi 0, %s97
      %s112 = sphi 0, %s98
      %s116 = sphi 0, %s116
      %s118 = sphi 0, %s116
      %s119 = sphi 0, %s118
      %s133 = sphi 0, %s119
      %s137 = sphi 0, %s137
      %s139 = sphi 0, %s137
      %s140 = sphi 0, %s139
      %s154 = sphi 0, %s140
      %s158 = sphi 0, %s158
      %s160 = sphi 0, %s158
      %s161 = sphi 0, %s160
      %s175 = sphi 0, %s161
      %s179 = sphi 0, %s179
      %s181 = sphi 0, %s179
      %s182 = sphi 0, %s181
      %s196 = sphi 0, %s182
      %s202 = sphi 0, %s204
      %s205 = sphi 0, %s202
      %s206 = sphi 0, %s205
      %s222 = sphi 0, %s206
      %s230 = sphi 0, %s232
      %s233 = sphi 0, %s230
      %s234 = sphi 0, %s233
      %s250 = sphi 0, %s234
    $region4: #{tpu_custom_call.1} parent=1 // loop_header_branch
      %24 = sbr.rel (%p22) target = $region8
    $region5: #{tpu_custom_call.1} parent=1 // loop_body
      %s26 = ssub.s32 %s21, 1
      %s27 = ssub.s32 %s21, 2
      %s34 = sadd.s32 1, %s29
      %p35 = scmp.ge.s32.totalorder %s34, 2
      %s36 = scalar_select %p35, 0, %s34
      %s37 = sadd.s32 1, %s28
      %s38 = scalar_select %p35, %s37, %s28
      %p39 = scmp.ge.s32.totalorder %s38, 2
      %s40 = scalar_select %p39, 0, %s38
      %s41 = ssub.s32 %s28, %s40
      %p42 = scmp.eq.s32.totalorder %s41, 0
      %s44 = sadd.s32 %s43, 1
      %s45 = scalar_select %p42, %s43, %s44
      %p48 = pneg %p42
      %p49 = scmp.eq.s32.totalorder %s21, 3
      %p50 = por %p48, %p49
      %p51 = scmp.ne.s32.totalorder %s43, %s46
      %p52 = scmp.eq.s32.totalorder %s21, 0
      %p53 = por %p51, %p52
      %p54 = scmp.ne.s32.totalorder %s43, %s46
      %p55 = scmp.eq.s32.totalorder %s26, 3
      %p56 = por %p54, %p55
      %p57 = scmp.ne.s32.totalorder %s46, %s47
      %p58 = scmp.eq.s32.totalorder %s26, 0
      %p59 = por %p57, %p58
      %p60 = scmp.ne.s32.totalorder %s46, %s47
      %p61 = scmp.eq.s32.totalorder %s27, 3
      %p62 = por %p60, %p61
      %p64 = scmp.ne.s32.totalorder %s47, %s63
      %p65 = scmp.eq.s32.totalorder %s27, 0
      %p66 = por %p64, %p65
      %s67 = ssub.s32 %s28, %s40
      %s68 = ssub.s32 %s29, %s36
      %s69 = sor.u32 %s67, %s68
      %p70 = scmp.eq.s32.totalorder %s69, 0
      %s72 = sadd.s32 %s71, 1
      %s73 = scalar_select %p70, %s71, %s72
      %p76 = pneg %p70
      %p77 = scmp.eq.s32.totalorder %s21, 3
      %p78 = por %p76, %p77
      %p79 = scmp.ne.s32.totalorder %s71, %s74
      %p80 = scmp.eq.s32.totalorder %s21, 0
      %p81 = por %p79, %p80
      %p82 = scmp.ne.s32.totalorder %s71, %s74
      %p83 = scmp.eq.s32.totalorder %s26, 3
      %p84 = por %p82, %p83
      %p85 = scmp.ne.s32.totalorder %s74, %s75
      %p86 = scmp.eq.s32.totalorder %s26, 0
      %p87 = por %p85, %p86
      %p88 = scmp.ne.s32.totalorder %s74, %s75
      %p89 = scmp.eq.s32.totalorder %s27, 3
      %p90 = por %p88, %p89
      %p92 = scmp.ne.s32.totalorder %s75, %s91
      %p93 = scmp.eq.s32.totalorder %s27, 0
      %p94 = por %p92, %p93
      %s96 = sadd.s32 %s95, 1
      %p99 = scmp.eq.s32.totalorder %s21, 3
      %p100 = scmp.ne.s32.totalorder %s95, %s97
      %p101 = scmp.eq.s32.totalorder %s21, 0
      %p102 = por %p100, %p101
      %p103 = scmp.ne.s32.totalorder %s95, %s97
      %p104 = scmp.eq.s32.totalorder %s26, 3
      %p105 = por %p103, %p104
      %p106 = scmp.ne.s32.totalorder %s97, %s98
      %p107 = scmp.eq.s32.totalorder %s26, 0
      %p108 = por %p106, %p107
      %p109 = scmp.ne.s32.totalorder %s97, %s98
      %p110 = scmp.eq.s32.totalorder %s27, 3
      %p111 = por %p109, %p110
      %p113 = scmp.ne.s32.totalorder %s98, %s112
      %p114 = scmp.eq.s32.totalorder %s27, 0
      %p115 = por %p113, %p114
      %s117 = sadd.s32 %s116, 1
      %p120 = scmp.eq.s32.totalorder %s21, 3
      %p121 = scmp.ne.s32.totalorder %s116, %s118
      %p122 = scmp.eq.s32.totalorder %s21, 0
      %p123 = por %p121, %p122
      %p124 = scmp.ne.s32.totalorder %s116, %s118
      %p125 = scmp.eq.s32.totalorder %s26, 3
      %p126 = por %p124, %p125
      %p127 = scmp.ne.s32.totalorder %s118, %s119
      %p128 = scmp.eq.s32.totalorder %s26, 0
      %p129 = por %p127, %p128
      %p130 = scmp.ne.s32.totalorder %s118, %s119
      %p131 = scmp.eq.s32.totalorder %s27, 3
      %p132 = por %p130, %p131
      %p134 = scmp.ne.s32.totalorder %s119, %s133
      %p135 = scmp.eq.s32.totalorder %s27, 0
      %p136 = por %p134, %p135
      %s138 = sadd.s32 %s137, 1
      %p141 = scmp.eq.s32.totalorder %s21, 3
      %p142 = scmp.ne.s32.totalorder %s137, %s139
      %p143 = scmp.eq.s32.totalorder %s21, 0
      %p144 = por %p142, %p143
      %p145 = scmp.ne.s32.totalorder %s137, %s139
      %p146 = scmp.eq.s32.totalorder %s26, 3
      %p147 = por %p145, %p146
      %p148 = scmp.ne.s32.totalorder %s139, %s140
      %p149 = scmp.eq.s32.totalorder %s26, 0
      %p150 = por %p148, %p149
      %p151 = scmp.ne.s32.totalorder %s139, %s140
      %p152 = scmp.eq.s32.totalorder %s27, 3
      %p153 = por %p151, %p152
      %p155 = scmp.ne.s32.totalorder %s140, %s154
      %p156 = scmp.eq.s32.totalorder %s27, 0
      %p157 = por %p155, %p156
      %s159 = sadd.s32 %s158, 1
      %p162 = scmp.eq.s32.totalorder %s21, 3
      %p163 = scmp.ne.s32.totalorder %s158, %s160
      %p164 = scmp.eq.s32.totalorder %s21, 0
      %p165 = por %p163, %p164
      %p166 = scmp.ne.s32.totalorder %s158, %s160
      %p167 = scmp.eq.s32.totalorder %s26, 3
      %p168 = por %p166, %p167
      %p169 = scmp.ne.s32.totalorder %s160, %s161
      %p170 = scmp.eq.s32.totalorder %s26, 0
      %p171 = por %p169, %p170
      %p172 = scmp.ne.s32.totalorder %s160, %s161
      %p173 = scmp.eq.s32.totalorder %s27, 3
      %p174 = por %p172, %p173
      %p176 = scmp.ne.s32.totalorder %s161, %s175
      %p177 = scmp.eq.s32.totalorder %s27, 0
      %p178 = por %p176, %p177
      %s180 = sadd.s32 %s179, 1
      %p183 = scmp.eq.s32.totalorder %s21, 3
      %p184 = scmp.ne.s32.totalorder %s179, %s181
      %p185 = scmp.eq.s32.totalorder %s21, 0
      %p186 = por %p184, %p185
      %p187 = scmp.ne.s32.totalorder %s179, %s181
      %p188 = scmp.eq.s32.totalorder %s26, 3
      %p189 = por %p187, %p188
      %p190 = scmp.ne.s32.totalorder %s181, %s182
      %p191 = scmp.eq.s32.totalorder %s26, 0
      %p192 = por %p190, %p191
      %p193 = scmp.ne.s32.totalorder %s181, %s182
      %p194 = scmp.eq.s32.totalorder %s27, 3
      %p195 = por %p193, %p194
      %p197 = scmp.ne.s32.totalorder %s182, %s196
      %p198 = scmp.eq.s32.totalorder %s27, 0
      %p199 = por %p197, %p198
      %s200 = ssub.s32 %s28, %s40
      %p201 = scmp.eq.s32.totalorder %s200, 0
      %s203 = sadd.s32 %s202, 1
      %s204 = scalar_select %p201, %s202, %s203
      %p207 = pneg %p201
      %p208 = scmp.eq.s32.totalorder %s21, 3
      %p209 = por %p207, %p208
      %p210 = scmp.ne.s32.totalorder %s202, %s205
      %p211 = scmp.eq.s32.totalorder %s21, 0
      %p212 = por %p210, %p211
      %p213 = scmp.ne.s32.totalorder %s202, %s205
      %p214 = scmp.eq.s32.totalorder %s26, 3
      %p215 = por %p213, %p214
      %p216 = scmp.ne.s32.totalorder %s205, %s206
      %p217 = scmp.eq.s32.totalorder %s26, 0
      %p218 = por %p216, %p217
      %p219 = scmp.ne.s32.totalorder %s205, %s206
      %p220 = scmp.eq.s32.totalorder %s27, 3
      %p221 = por %p219, %p220
      %p223 = scmp.ne.s32.totalorder %s206, %s222
      %p224 = scmp.eq.s32.totalorder %s27, 0
      %p225 = por %p223, %p224
      %s226 = ssub.s32 %s28, %s40
      %s227 = ssub.s32 %s29, %s36
      %s228 = sor.u32 %s226, %s227
      %p229 = scmp.eq.s32.totalorder %s228, 0
      %s231 = sadd.s32 %s230, 1
      %s232 = scalar_select %p229, %s230, %s231
      %p235 = pneg %p229
      %p236 = scmp.eq.s32.totalorder %s21, 3
      %p237 = por %p235, %p236
      %p238 = scmp.ne.s32.totalorder %s230, %s233
      %p239 = scmp.eq.s32.totalorder %s21, 0
      %p240 = por %p238, %p239
      %p241 = scmp.ne.s32.totalorder %s230, %s233
      %p242 = scmp.eq.s32.totalorder %s26, 3
      %p243 = por %p241, %p242
      %p244 = scmp.ne.s32.totalorder %s233, %s234
      %p245 = scmp.eq.s32.totalorder %s26, 0
      %p246 = por %p244, %p245
      %p247 = scmp.ne.s32.totalorder %s233, %s234
      %p248 = scmp.eq.s32.totalorder %s27, 3
      %p249 = por %p247, %p248
      %p251 = scmp.ne.s32.totalorder %s234, %s250
      %p252 = scmp.eq.s32.totalorder %s27, 0
      %p253 = por %p251, %p252
      %p254 = scmp.le.s32.totalorder 1, %s21
      %p255 = scmp.lt.s32.totalorder %s21, 5
      %p256 = pnand %p254, %p255
      %p257 = pneg %p256
      // Predicated region
      $region9: #{tpu_custom_call.1} parent=5 // pred_check
        _
      $region10: #{tpu_custom_call.1} parent=5 // pred_check_branch
        %259 = sbr.rel (%p256) target = $region12
      $region11: #{tpu_custom_call.1} parent=5 // pred_region
        %s260 = ssub.s32 %s21, 1
        // Predicated region
        $region13: #{tpu_custom_call.1} parent=11 // pred_check
          %p261 = pneg %p108
        $region14: #{tpu_custom_call.1} parent=11 // pred_check_branch
          %263 = sbr.rel (%p261) target = $region16
        $region15: #{tpu_custom_call.1} parent=11 // pred_region
          _
        $region16: #{tpu_custom_call.1} parent=11 // pred_fallthru
          _
        // Predicated region
        $region17: #{tpu_custom_call.1} parent=11 // pred_check
          %p264 = pneg %p129
        $region18: #{tpu_custom_call.1} parent=11 // pred_check_branch
          %266 = sbr.rel (%p264) target = $region20
        $region19: #{tpu_custom_call.1} parent=11 // pred_region
          _
        $region20: #{tpu_custom_call.1} parent=11 // pred_fallthru
          _
        // Predicated region
        $region21: #{tpu_custom_call.1} parent=11 // pred_check
          %p267 = pneg %p150
        $region22: #{tpu_custom_call.1} parent=11 // pred_check_branch
          %269 = sbr.rel (%p267) target = $region24
        $region23: #{tpu_custom_call.1} parent=11 // pred_region
          _
        $region24: #{tpu_custom_call.1} parent=11 // pred_fallthru
          _
        // Predicated region
        $region25: #{tpu_custom_call.1} parent=11 // pred_check
          %p270 = pneg %p171
        $region26: #{tpu_custom_call.1} parent=11 // pred_check_branch
          %272 = sbr.rel (%p270) target = $region28
        $region27: #{tpu_custom_call.1} parent=11 // pred_region
          _
        $region28: #{tpu_custom_call.1} parent=11 // pred_fallthru
          _
        // Predicated region
        $region29: #{tpu_custom_call.1} parent=11 // pred_check
          %p273 = pneg %p192
        $region30: #{tpu_custom_call.1} parent=11 // pred_check_branch
          %275 = sbr.rel (%p273) target = $region32
        $region31: #{tpu_custom_call.1} parent=11 // pred_region
          _
        $region32: #{tpu_custom_call.1} parent=11 // pred_fallthru
          _
      $region12: #{tpu_custom_call.1} parent=5 // pred_fallthru
        _
      %p276 = scmp.lt.s32.totalorder %s21, 4
      // Predicated region
      $region33: #{tpu_custom_call.1} parent=5 // pred_check
        %p277 = pneg %p276
      $region34: #{tpu_custom_call.1} parent=5 // pred_check_branch
        %279 = sbr.rel (%p277) target = $region36
      $region35: #{tpu_custom_call.1} parent=5 // pred_region
        // Predicated region
        $region37: #{tpu_custom_call.1} parent=35 // pred_check
          %p280 = pneg %p53
        $region38: #{tpu_custom_call.1} parent=35 // pred_check_branch
          %282 = sbr.rel (%p280) target = $region40
        $region39: #{tpu_custom_call.1} parent=35 // pred_region
          %p283 = scmp.lt.s32.totalorder %s28, 1
          %s284 = scalar_select %p283, %s28, 1
          %s285 = smul.addr %s284, 8
          %s286 = scalar_lea.vmem %s0, %s285
        $region40: #{tpu_custom_call.1} parent=35 // pred_fallthru
          _
        // Predicated region
        $region41: #{tpu_custom_call.1} parent=35 // pred_check
          %p287 = pneg %p81
        $region42: #{tpu_custom_call.1} parent=35 // pred_check_branch
          %289 = sbr.rel (%p287) target = $region44
        $region43: #{tpu_custom_call.1} parent=35 // pred_region
          %s290 = smul.u32 4, %s29
          %p291 = scmp.lt.s32.totalorder %s28, 1
          %s292 = scalar_select %p291, %s28, 1
          %p293 = scmp.lt.s32.totalorder %s290, 7
          %s294 = scalar_select %p293, %s290, 7
          %s295 = smul.addr %s292, 8
          %s296 = sadd.s32 %s294, %s295
          %s297 = smul.addr %s296, 8
          %s298 = scalar_lea.vmem %s1, %s297
          %s299 = smul.u32 4, %s29
        $region44: #{tpu_custom_call.1} parent=35 // pred_fallthru
          _
      $region36: #{tpu_custom_call.1} parent=5 // pred_fallthru
        _
      %p300 = scmp.le.s32.totalorder 1, %s21
      %p301 = scmp.lt.s32.totalorder %s21, 5
      %p302 = pnand %p300, %p301
      %p303 = pneg %p302
      // Predicated region
      $region45: #{tpu_custom_call.1} parent=5 // pred_check
        _
      $region46: #{tpu_custom_call.1} parent=5 // pred_check_branch
        %305 = sbr.rel (%p302) target = $region48
      $region47: #{tpu_custom_call.1} parent=5 // pred_region
        %s306 = ssub.s32 %s21, 1
        %p307 = scmp.lt.s32.totalorder %s30, 1
        %s308 = scalar_select %p307, %s30, 1
        %s309 = smul.addr %s308, 8
        %s310 = scalar_lea.vmem %s0, %s309
        %p311 = pneg %p59
        %p312 = pneg %p56
        %s313 = smul.u32 4, %s31
        %p314 = scmp.lt.s32.totalorder %s30, 1
        %s315 = scalar_select %p314, %s30, 1
        %p316 = scmp.lt.s32.totalorder %s313, 7
        %s317 = scalar_select %p316, %s313, 7
        %s318 = smul.addr %s315, 8
        %s319 = sadd.s32 %s317, %s318
        %s320 = smul.addr %s319, 8
        %s321 = scalar_lea.vmem %s1, %s320
        %p322 = pneg %p87
        %p323 = pneg %p84
        %p324 = pneg %p108
        %p325 = pneg %p105
        %p326 = pneg %p129
        %p327 = pneg %p126
        %p328 = pneg %p150
        %p329 = pneg %p147
        %p330 = pneg %p171
        %p331 = pneg %p168
        %p332 = pneg %p192
        %p333 = pneg %p189
        %p334 = pneg %p218
        %p335 = pneg %p215
        %s336 = sand.u32 %s205, 1
        %s337 = scalar_lea.sflag [#allocation3], %s336
        %s338 = sand.u32 %s205, 1
        %s339 = smul.addr %s338, 8
        %s340 = scalar_lea.vmem [#allocation2], %s339
        %p341 = pneg %p246
        %p342 = pneg %p243
        %s343 = sand.u32 %s233, 1
        %s344 = scalar_lea.sflag [#allocation5], %s343
        %s345 = sand.u32 %s233, 1
        %s346 = smul.addr %s345, 32
        %s347 = scalar_lea.vmem [#allocation4], %s346
        %p348 = scmp.lt.s32.totalorder %s30, 1
        %s349 = scalar_select %p348, %s30, 1
        %s350 = smul.addr %s349, 8
        %s351 = scalar_lea.vmem %s0, %s350
        %s352 = smul.u32 4, %s31
        %p353 = scmp.lt.s32.totalorder %s30, 1
        %s354 = scalar_select %p353, %s30, 1
        %p355 = scmp.lt.s32.totalorder %s352, 7
        %s356 = scalar_select %p355, %s352, 7
        %s357 = smul.addr %s354, 8
        %s358 = sadd.s32 %s356, %s357
        %s359 = smul.addr %s358, 8
        %s360 = scalar_lea.vmem %s1, %s359
        %s361 = smul.u32 4, %s31
        %s362 = smul.u32 4, %s31
        %p363 = scmp.eq.s32.totalorder %s31, 0
        // Predicated region
        $region49: #{tpu_custom_call.1} parent=47 // pred_check
          %p364 = pneg %p363
        $region50: #{tpu_custom_call.1} parent=47 // pred_check_branch
          %366 = sbr.rel (%p364) target = $region52
        $region51: #{tpu_custom_call.1} parent=47 // pred_region
          %v367 = vld [vmem:[%s6] sm:$0x1]
          %v369 = vlaneseq
          %v370 = vshrl.u32 %v369, 7
          %v371 = vsub.s32 0, %v370
          %v372 = vrot.slane %v367, %v371
          %vm374 = vcmask 261120
          %375 = vst.msk [vmem:[%s340] sm:$0xff] %vm374, %v372
        $region52: #{tpu_custom_call.1} parent=47 // pred_fallthru
          _
        %v376 = vld [vmem:[%s351] sm:$0xff]
        %s377 = smul.u32 %s31, 32
        %s378 = scalar_lea.vmem %s2, %s377
        %v379 = vld [vmem:[%s378] sm:$0xff]
        %v380 = vld [vmem:[%s378 + $0x8] sm:$0xff]
        %v381 = vld [vmem:[%s378 + $0x10] sm:$0xff]
        %v382 = vld [vmem:[%s378 + $0x18] sm:$0xff]
        %s383 = scalar_lea.vmem %s3, %s377
        %v384 = vld [vmem:[%s383] sm:$0xff]
        %v385 = vld [vmem:[%s383 + $0x8] sm:$0xff]
        %v386 = vld [vmem:[%s383 + $0x10] sm:$0xff]
        %v387 = vld [vmem:[%s383 + $0x18] sm:$0xff]
        %s388 = scalar_lea.vmem %s4, %s377
        %v389 = vld [vmem:[%s388] sm:$0xff]
        %v390 = vld [vmem:[%s388 + $0x8] sm:$0xff]
        %v391 = vld [vmem:[%s388 + $0x10] sm:$0xff]
        %v392 = vld [vmem:[%s388 + $0x18] sm:$0xff]
        %vm393 = vcmask 261120
        %v395 = vsel %vm393, %v376, 0
        %397 = vmatprep.subr.mxu0 0.0
        %398 = vmatpush1.msra.mxu0 %v379
        %399 = vmatprep.subr.mxu0 0.0
        %400 = vmatpush1.msra.mxu0 %v380
        %401 = vmatprep.subr.mxu0 0.0
        %402 = vmatpush1.msra.mxu0 %v381
        %403 = vmatprep.subr.mxu0 0.0
        %404 = vmatpush1.msra.mxu0 %v382
        %405 = vmatprep.subr.mxu0 0.0
        %406 = vmatpush1.msra.mxu0 0.0
        %407 = vmatprep.subr.mxu0 0.0
        %408 = vmatpush1.msra.mxu0 0.0
        %409 = vmatprep.subr.mxu0 0.0
        %410 = vmatpush1.msra.mxu0 0.0
        %411 = vmatprep.subr.mxu0 0.0
        %412 = vmatpush1.msra.mxu0 0.0
        %413 = vmatprep.subr.mxu0 0.0
        %414 = vmatpush1.msra.mxu0 0.0
        %415 = vmatprep.subr.mxu0 0.0
        %416 = vmatpush1.msra.mxu0 0.0
        %417 = vmatprep.subr.mxu0 0.0
        %418 = vmatpush1.msra.mxu0 0.0
        %419 = vmatprep.subr.mxu0 0.0
        %420 = vmatpush1.msra.mxu0 0.0
        %421 = vmatprep.subr.mxu0 0.0
        %422 = vmatpush1.msra.mxu0 0.0
        %423 = vmatprep.subr.mxu0 0.0
        %424 = vmatpush1.msra.mxu0 0.0
        %425 = vmatprep.subr.mxu0 0.0
        %426 = vmatpush1.msra.mxu0 0.0
        %427 = vmatprep.subr.mxu0 0.0
        %428 = vmatpush1.msra.mxu0 0.0
        %429 = vmatprep.subr.mxu0 0.0
        %430 = vmatpush1.msra.mxu0 0.0
        %431 = vmatprep.subr.mxu0 0.0
        %432 = vmatpush1.msra.mxu0 0.0
        %433 = vmatprep.subr.mxu0 0.0
        %434 = vmatpush1.msra.mxu0 0.0
        %435 = vmatprep.subr.mxu0 0.0
        %436 = vmatpush1.msra.mxu0 0.0
        %437 = vmatprep.subr.mxu0 0.0
        %438 = vmatpush1.msra.mxu0 0.0
        %439 = vmatprep.subr.mxu0 0.0
        %440 = vmatpush1.msra.mxu0 0.0
        %441 = vmatprep.subr.mxu0 0.0
        %442 = vmatpush1.msra.mxu0 0.0
        %443 = vmatprep.subr.mxu0 0.0
        %444 = vmatpush1.msra.mxu0 0.0
        %445 = vmatprep.subr.mxu0 0.0
        %446 = vmatpush1.msra.mxu0 0.0
        %447 = vmatprep.subr.mxu0 0.0
        %448 = vmatpush1.msra.mxu0 0.0
        %449 = vmatprep.subr.mxu0 0.0
        %450 = vmatpush1.msra.mxu0 0.0
        %451 = vmatprep.subr.mxu0 0.0
        %452 = vmatpush1.msra.mxu0 0.0
        %453 = vmatprep.subr.mxu0 0.0
        %454 = vmatpush1.msra.mxu0 0.0
        %455 = vmatprep.subr.mxu0 0.0
        %456 = vmatpush1.msra.mxu0 0.0
        %457 = vmatprep.subr.mxu0 0.0
        %458 = vmatpush1.msra.mxu0 0.0
        %459 = vmatprep.subr.mxu0 0.0
        %460 = vmatpush1.msra.mxu0 0.0
        %461 = vmatprep.mubr.f32.mxu0 0.0
        %462 = vmatmul.mubr.f32.gmra.mrb[0].mxu0 %v395
        %v463 = vpop.f32.mrb[0].mxu0
        %v464 = vadd.f32 0.0, %v463
        %v465 = vpop.f32.mrb[0].mxu0
        %466 = vdwg.mxu0
        %467 = vmatprep.subr.mxu0 0.0
        %468 = vmatpush1.msra.mxu0 %v384
        %469 = vmatprep.subr.mxu0 0.0
        %470 = vmatpush1.msra.mxu0 %v385
        %471 = vmatprep.subr.mxu0 0.0
        %472 = vmatpush1.msra.mxu0 %v386
        %473 = vmatprep.subr.mxu0 0.0
        %474 = vmatpush1.msra.mxu0 %v387
        %475 = vmatprep.subr.mxu0 0.0
        %476 = vmatpush1.msra.mxu0 0.0
        %477 = vmatprep.subr.mxu0 0.0
        %478 = vmatpush1.msra.mxu0 0.0
        %479 = vmatprep.subr.mxu0 0.0
        %480 = vmatpush1.msra.mxu0 0.0
        %481 = vmatprep.subr.mxu0 0.0
        %482 = vmatpush1.msra.mxu0 0.0
        %483 = vmatprep.subr.mxu0 0.0
        %484 = vmatpush1.msra.mxu0 0.0
        %485 = vmatprep.subr.mxu0 0.0
        %486 = vmatpush1.msra.mxu0 0.0
        %487 = vmatprep.subr.mxu0 0.0
        %488 = vmatpush1.msra.mxu0 0.0
        %489 = vmatprep.subr.mxu0 0.0
        %490 = vmatpush1.msra.mxu0 0.0
        %491 = vmatprep.subr.mxu0 0.0
        %492 = vmatpush1.msra.mxu0 0.0
        %493 = vmatprep.subr.mxu0 0.0
        %494 = vmatpush1.msra.mxu0 0.0
        %495 = vmatprep.subr.mxu0 0.0
        %496 = vmatpush1.msra.mxu0 0.0
        %497 = vmatprep.subr.mxu0 0.0
        %498 = vmatpush1.msra.mxu0 0.0
        %499 = vmatprep.subr.mxu0 0.0
        %500 = vmatpush1.msra.mxu0 0.0
        %501 = vmatprep.subr.mxu0 0.0
        %502 = vmatpush1.msra.mxu0 0.0
        %503 = vmatprep.subr.mxu0 0.0
        %504 = vmatpush1.msra.mxu0 0.0
        %505 = vmatprep.subr.mxu0 0.0
        %506 = vmatpush1.msra.mxu0 0.0
        %507 = vmatprep.subr.mxu0 0.0
        %508 = vmatpush1.msra.mxu0 0.0
        %509 = vmatprep.subr.mxu0 0.0
        %510 = vmatpush1.msra.mxu0 0.0
        %511 = vmatprep.subr.mxu0 0.0
        %512 = vmatpush1.msra.mxu0 0.0
        %513 = vmatprep.subr.mxu0 0.0
        %514 = vmatpush1.msra.mxu0 0.0
        %515 = vmatprep.subr.mxu0 0.0
        %516 = vmatpush1.msra.mxu0 0.0
        %517 = vmatprep.subr.mxu0 0.0
        %518 = vmatpush1.msra.mxu0 0.0
        %519 = vmatprep.subr.mxu0 0.0
        %520 = vmatpush1.msra.mxu0 0.0
        %521 = vmatprep.subr.mxu0 0.0
        %522 = vmatpush1.msra.mxu0 0.0
        %523 = vmatprep.subr.mxu0 0.0
        %524 = vmatpush1.msra.mxu0 0.0
        %525 = vmatprep.subr.mxu0 0.0
        %526 = vmatpush1.msra.mxu0 0.0
        %527 = vmatprep.subr.mxu0 0.0
        %528 = vmatpush1.msra.mxu0 0.0
        %529 = vmatprep.subr.mxu0 0.0
        %530 = vmatpush1.msra.mxu0 0.0
        %531 = vmatprep.mubr.f32.mxu0 0.0
        %532 = vmatmul.mubr.f32.gmra.mrb[0].mxu0 %v395
        %v533 = vpop.f32.mrb[0].mxu0
        %v534 = vadd.f32 0.0, %v533
        %v535 = vpop.f32.mrb[0].mxu0
        %536 = vdwg.mxu0
        %537 = vmatprep.subr.mxu0 0.0
        %538 = vmatpush1.msra.mxu0 %v389
        %539 = vmatprep.subr.mxu0 0.0
        %540 = vmatpush1.msra.mxu0 %v390
        %541 = vmatprep.subr.mxu0 0.0
        %542 = vmatpush1.msra.mxu0 %v391
        %543 = vmatprep.subr.mxu0 0.0
        %544 = vmatpush1.msra.mxu0 %v392
        %545 = vmatprep.subr.mxu0 0.0
        %546 = vmatpush1.msra.mxu0 0.0
        %547 = vmatprep.subr.mxu0 0.0
        %548 = vmatpush1.msra.mxu0 0.0
        %549 = vmatprep.subr.mxu0 0.0
        %550 = vmatpush1.msra.mxu0 0.0
        %551 = vmatprep.subr.mxu0 0.0
        %552 = vmatpush1.msra.mxu0 0.0
        %553 = vmatprep.subr.mxu0 0.0
        %554 = vmatpush1.msra.mxu0 0.0
        %555 = vmatprep.subr.mxu0 0.0
        %556 = vmatpush1.msra.mxu0 0.0
        %557 = vmatprep.subr.mxu0 0.0
        %558 = vmatpush1.msra.mxu0 0.0
        %559 = vmatprep.subr.mxu0 0.0
        %560 = vmatpush1.msra.mxu0 0.0
        %561 = vmatprep.subr.mxu0 0.0
        %562 = vmatpush1.msra.mxu0 0.0
        %563 = vmatprep.subr.mxu0 0.0
        %564 = vmatpush1.msra.mxu0 0.0
        %565 = vmatprep.subr.mxu0 0.0
        %566 = vmatpush1.msra.mxu0 0.0
        %567 = vmatprep.subr.mxu0 0.0
        %568 = vmatpush1.msra.mxu0 0.0
        %569 = vmatprep.subr.mxu0 0.0
        %570 = vmatpush1.msra.mxu0 0.0
        %571 = vmatprep.subr.mxu0 0.0
        %572 = vmatpush1.msra.mxu0 0.0
        %573 = vmatprep.subr.mxu0 0.0
        %574 = vmatpush1.msra.mxu0 0.0
        %575 = vmatprep.subr.mxu0 0.0
        %576 = vmatpush1.msra.mxu0 0.0
        %577 = vmatprep.subr.mxu0 0.0
        %578 = vmatpush1.msra.mxu0 0.0
        %579 = vmatprep.subr.mxu0 0.0
        %580 = vmatpush1.msra.mxu0 0.0
        %581 = vmatprep.subr.mxu0 0.0
        %582 = vmatpush1.msra.mxu0 0.0
        %583 = vmatprep.subr.mxu0 0.0
        %584 = vmatpush1.msra.mxu0 0.0
        %585 = vmatprep.subr.mxu0 0.0
        %586 = vmatpush1.msra.mxu0 0.0
        %587 = vmatprep.subr.mxu0 0.0
        %588 = vmatpush1.msra.mxu0 0.0
        %589 = vmatprep.subr.mxu0 0.0
        %590 = vmatpush1.msra.mxu0 0.0
        %591 = vmatprep.subr.mxu0 0.0
        %592 = vmatpush1.msra.mxu0 0.0
        %593 = vmatprep.subr.mxu0 0.0
        %594 = vmatpush1.msra.mxu0 0.0
        %595 = vmatprep.subr.mxu0 0.0
        %596 = vmatpush1.msra.mxu0 0.0
        %597 = vmatprep.subr.mxu0 0.0
        %598 = vmatpush1.msra.mxu0 0.0
        %599 = vmatprep.subr.mxu0 0.0
        %600 = vmatpush1.msra.mxu0 0.0
        %601 = vmatprep.mubr.f32.mxu0 0.0
        %602 = vmatmul.mubr.f32.gmra.mrb[0].mxu0 %v395
        %v603 = vpop.f32.mrb[0].mxu0
        %v604 = vadd.f32 0.0, %v603
        %v605 = vpop.f32.mrb[0].mxu0
        %606 = vdwg.mxu0
        %s607 = smul.u32 %s31, 16
        %s608 = scalar_lea.vmem %s5, %s607
        %v609 = vld [vmem:[%s608] sm:$0xff]
        %v610 = vld [vmem:[%s608 + $0x8] sm:$0xff]
        %v611 = vld [vmem:[%s360] sm:$0xff]
        %v612 = vld [vmem:[%s360 + $0x8] sm:$0xff]
        %v613 = vld [vmem:[%s360 + $0x10] sm:$0xff]
        %v614 = vld [vmem:[%s360 + $0x18] sm:$0xff]
        %vm615 = vcmask 31744
        %v617 = vsel %vm615, %v464, 0
        %v620 = vsel %vm615, %v534, 0
        %622 = vmatprep.subr.mxu0 0.0
        %623 = vmatpush1.xpose.msra.mxu0 %v620
        %624 = vmatprep.subr.mxu0 0.0
        %625 = vmatpush1.xpose.msra.mxu0 0.0
        %626 = vmatprep.subr.mxu0 0.0
        %627 = vmatpush1.xpose.msra.mxu0 0.0
        %628 = vmatprep.subr.mxu0 0.0
        %629 = vmatpush1.xpose.msra.mxu0 0.0
        %630 = vmatprep.subr.mxu0 0.0
        %631 = vmatpush1.xpose.msra.mxu0 0.0
        %632 = vmatprep.subr.mxu0 0.0
        %633 = vmatpush1.xpose.msra.mxu0 0.0
        %634 = vmatprep.subr.mxu0 0.0
        %635 = vmatpush1.xpose.msra.mxu0 0.0
        %636 = vmatprep.subr.mxu0 0.0
        %637 = vmatpush1.xpose.msra.mxu0 0.0
        %638 = vmatprep.subr.mxu0 0.0
        %639 = vmatpush1.xpose.msra.mxu0 0.0
        %640 = vmatprep.subr.mxu0 0.0
        %641 = vmatpush1.xpose.msra.mxu0 0.0
        %642 = vmatprep.subr.mxu0 0.0
        %643 = vmatpush1.xpose.msra.mxu0 0.0
        %644 = vmatprep.subr.mxu0 0.0
        %645 = vmatpush1.xpose.msra.mxu0 0.0
        %646 = vmatprep.subr.mxu0 0.0
        %647 = vmatpush1.xpose.msra.mxu0 0.0
        %648 = vmatprep.subr.mxu0 0.0
        %649 = vmatpush1.xpose.msra.mxu0 0.0
        %650 = vmatprep.subr.mxu0 0.0
        %651 = vmatpush1.xpose.msra.mxu0 0.0
        %652 = vmatprep.subr.mxu0 0.0
        %653 = vmatpush1.xpose.msra.mxu0 0.0
        %654 = vmatprep.subr.mxu0 0.0
        %655 = vmatpush1.xpose.msra.mxu0 0.0
        %656 = vmatprep.subr.mxu0 0.0
        %657 = vmatpush1.xpose.msra.mxu0 0.0
        %658 = vmatprep.subr.mxu0 0.0
        %659 = vmatpush1.xpose.msra.mxu0 0.0
        %660 = vmatprep.subr.mxu0 0.0
        %661 = vmatpush1.xpose.msra.mxu0 0.0
        %662 = vmatprep.subr.mxu0 0.0
        %663 = vmatpush1.xpose.msra.mxu0 0.0
        %664 = vmatprep.subr.mxu0 0.0
        %665 = vmatpush1.xpose.msra.mxu0 0.0
        %666 = vmatprep.subr.mxu0 0.0
        %667 = vmatpush1.xpose.msra.mxu0 0.0
        %668 = vmatprep.subr.mxu0 0.0
        %669 = vmatpush1.xpose.msra.mxu0 0.0
        %670 = vmatprep.subr.mxu0 0.0
        %671 = vmatpush1.xpose.msra.mxu0 0.0
        %672 = vmatprep.subr.mxu0 0.0
        %673 = vmatpush1.xpose.msra.mxu0 0.0
        %674 = vmatprep.subr.mxu0 0.0
        %675 = vmatpush1.xpose.msra.mxu0 0.0
        %676 = vmatprep.subr.mxu0 0.0
        %677 = vmatpush1.xpose.msra.mxu0 0.0
        %678 = vmatprep.subr.mxu0 0.0
        %679 = vmatpush1.xpose.msra.mxu0 0.0
        %680 = vmatprep.subr.mxu0 0.0
        %681 = vmatpush1.xpose.msra.mxu0 0.0
        %682 = vmatprep.subr.mxu0 0.0
        %683 = vmatpush1.xpose.msra.mxu0 0.0
        %684 = vmatprep.subr.mxu0 0.0
        %685 = vmatpush1.xpose.msra.mxu0 0.0
        %686 = vmatprep.mubr.f32.mxu0 0.0
        %687 = vmatmul.mubr.f32.gmra.mrb[0].mxu0 %v617
        %v688 = vpop.f32.mrb[0].mxu0
        %v689 = vadd.f32 0.0, %v688
        %v690 = vpop.f32.mrb[0].mxu0
        %691 = vdwg.mxu0
        %v692 = vmul.f32 %v689, %v611
        %vm693 = vcmask 64512
        %694 = vst.msk [vmem:[%s347] sm:$0xff] %vm693, %v692
        %v695 = vmul.f32 %v692, 0.5
        %v696 = vsel %vm693, %v695, -inf
        %697 = vmax.xlane.f32.xlu0 %v696
        %v698 = vpop.xlane.xlu0 %697
        %v699 = vsub.f32 %v695, %v698
        %v700 = vmul.f32 %v699, 1.442695
        %v701 = vpow.pop %v700
        %v702 = vsel %vm693, %v701, 0.0
        %703 = vadd.xlane.f32.xlu0 %v702
        %v704 = vpop.xlane.xlu0 %703
        %v706 = vsel %vm693, %v701, 0
        %708 = vmatprep.subr.mxu0 0.0
        %709 = vmatpush1.msra.mxu0 %v604
        %710 = vmatprep.subr.mxu0 0.0
        %711 = vmatpush1.msra.mxu0 0.0
        %712 = vmatprep.subr.mxu0 0.0
        %713 = vmatpush1.msra.mxu0 0.0
        %714 = vmatprep.subr.mxu0 0.0
        %715 = vmatpush1.msra.mxu0 0.0
        %716 = vmatprep.subr.mxu0 0.0
        %717 = vmatpush1.msra.mxu0 0.0
        %718 = vmatprep.subr.mxu0 0.0
        %719 = vmatpush1.msra.mxu0 0.0
        %720 = vmatprep.subr.mxu0 0.0
        %721 = vmatpush1.msra.mxu0 0.0
        %722 = vmatprep.subr.mxu0 0.0
        %723 = vmatpush1.msra.mxu0 0.0
        %724 = vmatprep.subr.mxu0 0.0
        %725 = vmatpush1.msra.mxu0 0.0
        %726 = vmatprep.subr.mxu0 0.0
        %727 = vmatpush1.msra.mxu0 0.0
        %728 = vmatprep.subr.mxu0 0.0
        %729 = vmatpush1.msra.mxu0 0.0
        %730 = vmatprep.subr.mxu0 0.0
        %731 = vmatpush1.msra.mxu0 0.0
        %732 = vmatprep.subr.mxu0 0.0
        %733 = vmatpush1.msra.mxu0 0.0
        %734 = vmatprep.subr.mxu0 0.0
        %735 = vmatpush1.msra.mxu0 0.0
        %736 = vmatprep.subr.mxu0 0.0
        %737 = vmatpush1.msra.mxu0 0.0
        %738 = vmatprep.subr.mxu0 0.0
        %739 = vmatpush1.msra.mxu0 0.0
        %740 = vmatprep.subr.mxu0 0.0
        %741 = vmatpush1.msra.mxu0 0.0
        %742 = vmatprep.subr.mxu0 0.0
        %743 = vmatpush1.msra.mxu0 0.0
        %744 = vmatprep.subr.mxu0 0.0
        %745 = vmatpush1.msra.mxu0 0.0
        %746 = vmatprep.subr.mxu0 0.0
        %747 = vmatpush1.msra.mxu0 0.0
        %748 = vmatprep.subr.mxu0 0.0
        %749 = vmatpush1.msra.mxu0 0.0
        %750 = vmatprep.subr.mxu0 0.0
        %751 = vmatpush1.msra.mxu0 0.0
        %752 = vmatprep.subr.mxu0 0.0
        %753 = vmatpush1.msra.mxu0 0.0
        %754 = vmatprep.subr.mxu0 0.0
        %755 = vmatpush1.msra.mxu0 0.0
        %756 = vmatprep.subr.mxu0 0.0
        %757 = vmatpush1.msra.mxu0 0.0
        %758 = vmatprep.subr.mxu0 0.0
        %759 = vmatpush1.msra.mxu0 0.0
        %760 = vmatprep.subr.mxu0 0.0
        %761 = vmatpush1.msra.mxu0 0.0
        %762 = vmatprep.subr.mxu0 0.0
        %763 = vmatpush1.msra.mxu0 0.0
        %764 = vmatprep.subr.mxu0 0.0
        %765 = vmatpush1.msra.mxu0 0.0
        %766 = vmatprep.subr.mxu0 0.0
        %767 = vmatpush1.msra.mxu0 0.0
        %768 = vmatprep.subr.mxu0 0.0
        %769 = vmatpush1.msra.mxu0 0.0
        %770 = vmatprep.subr.mxu0 0.0
        %771 = vmatpush1.msra.mxu0 0.0
        %772 = vmatprep.mubr.f32.mxu0 0.0
        %773 = vmatmul.mubr.f32.gmra.mrb[0].mxu0 %v706
        %v774 = vpop.f32.mrb[0].mxu0
        %v775 = vadd.f32 0.0, %v774
        %v776 = vpop.f32.mrb[0].mxu0
        %777 = vdwg.mxu0
        %v778 = vrcp.pop %v704
        %v779 = vmul.f32 %v775, %v778
        %780 = vrot.lane.b32.xlu0 %v464, 124
        %v781 = vpop.permute.xlu0 %780
        %782 = vrot.lane.b32.xlu0 %v534, 124
        %v783 = vpop.permute.xlu0 %782
        %v784 = vsel %vm615, %v781, 0
        %v786 = vsel %vm615, %v783, 0
        %788 = vmatprep.subr.mxu0 0.0
        %789 = vmatpush1.xpose.msra.mxu0 %v786
        %790 = vmatprep.subr.mxu0 0.0
        %791 = vmatpush1.xpose.msra.mxu0 0.0
        %792 = vmatprep.subr.mxu0 0.0
        %793 = vmatpush1.xpose.msra.mxu0 0.0
        %794 = vmatprep.subr.mxu0 0.0
        %795 = vmatpush1.xpose.msra.mxu0 0.0
        %796 = vmatprep.subr.mxu0 0.0
        %797 = vmatpush1.xpose.msra.mxu0 0.0
        %798 = vmatprep.subr.mxu0 0.0
        %799 = vmatpush1.xpose.msra.mxu0 0.0
        %800 = vmatprep.subr.mxu0 0.0
        %801 = vmatpush1.xpose.msra.mxu0 0.0
        %802 = vmatprep.subr.mxu0 0.0
        %803 = vmatpush1.xpose.msra.mxu0 0.0
        %804 = vmatprep.subr.mxu0 0.0
        %805 = vmatpush1.xpose.msra.mxu0 0.0
        %806 = vmatprep.subr.mxu0 0.0
        %807 = vmatpush1.xpose.msra.mxu0 0.0
        %808 = vmatprep.subr.mxu0 0.0
        %809 = vmatpush1.xpose.msra.mxu0 0.0
        %810 = vmatprep.subr.mxu0 0.0
        %811 = vmatpush1.xpose.msra.mxu0 0.0
        %812 = vmatprep.subr.mxu0 0.0
        %813 = vmatpush1.xpose.msra.mxu0 0.0
        %814 = vmatprep.subr.mxu0 0.0
        %815 = vmatpush1.xpose.msra.mxu0 0.0
        %816 = vmatprep.subr.mxu0 0.0
        %817 = vmatpush1.xpose.msra.mxu0 0.0
        %818 = vmatprep.subr.mxu0 0.0
        %819 = vmatpush1.xpose.msra.mxu0 0.0
        %820 = vmatprep.subr.mxu0 0.0
        %821 = vmatpush1.xpose.msra.mxu0 0.0
        %822 = vmatprep.subr.mxu0 0.0
        %823 = vmatpush1.xpose.msra.mxu0 0.0
        %824 = vmatprep.subr.mxu0 0.0
        %825 = vmatpush1.xpose.msra.mxu0 0.0
        %826 = vmatprep.subr.mxu0 0.0
        %827 = vmatpush1.xpose.msra.mxu0 0.0
        %828 = vmatprep.subr.mxu0 0.0
        %829 = vmatpush1.xpose.msra.mxu0 0.0
        %830 = vmatprep.subr.mxu0 0.0
        %831 = vmatpush1.xpose.msra.mxu0 0.0
        %832 = vmatprep.subr.mxu0 0.0
        %833 = vmatpush1.xpose.msra.mxu0 0.0
        %834 = vmatprep.subr.mxu0 0.0
        %835 = vmatpush1.xpose.msra.mxu0 0.0
        %836 = vmatprep.subr.mxu0 0.0
        %837 = vmatpush1.xpose.msra.mxu0 0.0
        %838 = vmatprep.subr.mxu0 0.0
        %839 = vmatpush1.xpose.msra.mxu0 0.0
        %840 = vmatprep.subr.mxu0 0.0
        %841 = vmatpush1.xpose.msra.mxu0 0.0
        %842 = vmatprep.subr.mxu0 0.0
        %843 = vmatpush1.xpose.msra.mxu0 0.0
        %844 = vmatprep.subr.mxu0 0.0
        %845 = vmatpush1.xpose.msra.mxu0 0.0
        %846 = vmatprep.subr.mxu0 0.0
        %847 = vmatpush1.xpose.msra.mxu0 0.0
        %848 = vmatprep.subr.mxu0 0.0
        %849 = vmatpush1.xpose.msra.mxu0 0.0
        %850 = vmatprep.subr.mxu0 0.0
        %851 = vmatpush1.xpose.msra.mxu0 0.0
        %852 = vmatprep.mubr.f32.mxu0 0.0
        %853 = vmatmul.mubr.f32.gmra.mrb[0].mxu0 %v784
        %v854 = vpop.f32.mrb[0].mxu0
        %v855 = vadd.f32 0.0, %v854
        %v856 = vpop.f32.mrb[0].mxu0
        %857 = vdwg.mxu0
        %v858 = vmul.f32 %v855, %v612
        %s859 = scalar_lea.vmem %s347, 8 [#allocation4]
        %860 = vst.msk [vmem:[%s859] sm:$0xff] %vm693, %v858
        %v861 = vmul.f32 %v858, 0.5
        %v862 = vsel %vm693, %v861, -inf
        %863 = vmax.xlane.f32.xlu0 %v862
        %v864 = vpop.xlane.xlu0 %863
        %v865 = vsub.f32 %v861, %v864
        %v866 = vmul.f32 %v865, 1.442695
        %v867 = vpow.pop %v866
        %v868 = vsel %vm693, %v867, 0.0
        %869 = vadd.xlane.f32.xlu0 %v868
        %v870 = vpop.xlane.xlu0 %869
        %872 = vrot.lane.b32.xlu0 %v604, 124
        %v873 = vpop.permute.xlu0 %872
        %v876 = vsel %vm693, %v867, 0
        %878 = vmatprep.subr.mxu0 0.0
        %879 = vmatpush1.msra.mxu0 %v873
        %880 = vmatprep.subr.mxu0 0.0
        %881 = vmatpush1.msra.mxu0 0.0
        %882 = vmatprep.subr.mxu0 0.0
        %883 = vmatpush1.msra.mxu0 0.0
        %884 = vmatprep.subr.mxu0 0.0
        %885 = vmatpush1.msra.mxu0 0.0
        %886 = vmatprep.subr.mxu0 0.0
        %887 = vmatpush1.msra.mxu0 0.0
        %888 = vmatprep.subr.mxu0 0.0
        %889 = vmatpush1.msra.mxu0 0.0
        %890 = vmatprep.subr.mxu0 0.0
        %891 = vmatpush1.msra.mxu0 0.0
        %892 = vmatprep.subr.mxu0 0.0
        %893 = vmatpush1.msra.mxu0 0.0
        %894 = vmatprep.subr.mxu0 0.0
        %895 = vmatpush1.msra.mxu0 0.0
        %896 = vmatprep.subr.mxu0 0.0
        %897 = vmatpush1.msra.mxu0 0.0
        %898 = vmatprep.subr.mxu0 0.0
        %899 = vmatpush1.msra.mxu0 0.0
        %900 = vmatprep.subr.mxu0 0.0
        %901 = vmatpush1.msra.mxu0 0.0
        %902 = vmatprep.subr.mxu0 0.0
        %903 = vmatpush1.msra.mxu0 0.0
        %904 = vmatprep.subr.mxu0 0.0
        %905 = vmatpush1.msra.mxu0 0.0
        %906 = vmatprep.subr.mxu0 0.0
        %907 = vmatpush1.msra.mxu0 0.0
        %908 = vmatprep.subr.mxu0 0.0
        %909 = vmatpush1.msra.mxu0 0.0
        %910 = vmatprep.subr.mxu0 0.0
        %911 = vmatpush1.msra.mxu0 0.0
        %912 = vmatprep.subr.mxu0 0.0
        %913 = vmatpush1.msra.mxu0 0.0
        %914 = vmatprep.subr.mxu0 0.0
        %915 = vmatpush1.msra.mxu0 0.0
        %916 = vmatprep.subr.mxu0 0.0
        %917 = vmatpush1.msra.mxu0 0.0
        %918 = vmatprep.subr.mxu0 0.0
        %919 = vmatpush1.msra.mxu0 0.0
        %920 = vmatprep.subr.mxu0 0.0
        %921 = vmatpush1.msra.mxu0 0.0
        %922 = vmatprep.subr.mxu0 0.0
        %923 = vmatpush1.msra.mxu0 0.0
        %924 = vmatprep.subr.mxu0 0.0
        %925 = vmatpush1.msra.mxu0 0.0
        %926 = vmatprep.subr.mxu0 0.0
        %927 = vmatpush1.msra.mxu0 0.0
        %928 = vmatprep.subr.mxu0 0.0
        %929 = vmatpush1.msra.mxu0 0.0
        %930 = vmatprep.subr.mxu0 0.0
        %931 = vmatpush1.msra.mxu0 0.0
        %932 = vmatprep.subr.mxu0 0.0
        %933 = vmatpush1.msra.mxu0 0.0
        %934 = vmatprep.subr.mxu0 0.0
        %935 = vmatpush1.msra.mxu0 0.0
        %936 = vmatprep.subr.mxu0 0.0
        %937 = vmatpush1.msra.mxu0 0.0
        %938 = vmatprep.subr.mxu0 0.0
        %939 = vmatpush1.msra.mxu0 0.0
        %940 = vmatprep.subr.mxu0 0.0
        %941 = vmatpush1.msra.mxu0 0.0
        %942 = vmatprep.mubr.f32.mxu0 0.0
        %943 = vmatmul.mubr.f32.gmra.mrb[0].mxu0 %v876
        %v944 = vpop.f32.mrb[0].mxu0
        %v945 = vadd.f32 0.0, %v944
        %v946 = vpop.f32.mrb[0].mxu0
        %947 = vdwg.mxu0
        %v948 = vrcp.pop %v870
        %v949 = vmul.f32 %v945, %v948
        %v951 = vrot.slane %v609, 4
        %v953 = vsel %vm615, %v949, 0
        %vm955 = vcmask 1043456
        %v956 = vsel %vm955, %v951, 0
        %958 = vmatprep.subr.mxu0 0.0
        %959 = vmatpush1.msra.mxu0 %v956
        %960 = vmatprep.subr.mxu0 0.0
        %961 = vmatpush1.msra.mxu0 0.0
        %962 = vmatprep.subr.mxu0 0.0
        %963 = vmatpush1.msra.mxu0 0.0
        %964 = vmatprep.subr.mxu0 0.0
        %965 = vmatpush1.msra.mxu0 0.0
        %966 = vmatprep.subr.mxu0 0.0
        %967 = vmatpush1.msra.mxu0 0.0
        %968 = vmatprep.subr.mxu0 0.0
        %969 = vmatpush1.msra.mxu0 0.0
        %970 = vmatprep.subr.mxu0 0.0
        %971 = vmatpush1.msra.mxu0 0.0
        %972 = vmatprep.subr.mxu0 0.0
        %973 = vmatpush1.msra.mxu0 0.0
        %974 = vmatprep.subr.mxu0 0.0
        %975 = vmatpush1.msra.mxu0 0.0
        %976 = vmatprep.subr.mxu0 0.0
        %977 = vmatpush1.msra.mxu0 0.0
        %978 = vmatprep.subr.mxu0 0.0
        %979 = vmatpush1.msra.mxu0 0.0
        %980 = vmatprep.subr.mxu0 0.0
        %981 = vmatpush1.msra.mxu0 0.0
        %982 = vmatprep.subr.mxu0 0.0
        %983 = vmatpush1.msra.mxu0 0.0
        %984 = vmatprep.subr.mxu0 0.0
        %985 = vmatpush1.msra.mxu0 0.0
        %986 = vmatprep.subr.mxu0 0.0
        %987 = vmatpush1.msra.mxu0 0.0
        %988 = vmatprep.subr.mxu0 0.0
        %989 = vmatpush1.msra.mxu0 0.0
        %990 = vmatprep.subr.mxu0 0.0
        %991 = vmatpush1.msra.mxu0 0.0
        %992 = vmatprep.subr.mxu0 0.0
        %993 = vmatpush1.msra.mxu0 0.0
        %994 = vmatprep.subr.mxu0 0.0
        %995 = vmatpush1.msra.mxu0 0.0
        %996 = vmatprep.subr.mxu0 0.0
        %997 = vmatpush1.msra.mxu0 0.0
        %998 = vmatprep.subr.mxu0 0.0
        %999 = vmatpush1.msra.mxu0 0.0
        %1000 = vmatprep.subr.mxu0 0.0
        %1001 = vmatpush1.msra.mxu0 0.0
        %1002 = vmatprep.subr.mxu0 0.0
        %1003 = vmatpush1.msra.mxu0 0.0
        %1004 = vmatprep.subr.mxu0 0.0
        %1005 = vmatpush1.msra.mxu0 0.0
        %1006 = vmatprep.subr.mxu0 0.0
        %1007 = vmatpush1.msra.mxu0 0.0
        %1008 = vmatprep.subr.mxu0 0.0
        %1009 = vmatpush1.msra.mxu0 0.0
        %1010 = vmatprep.subr.mxu0 0.0
        %1011 = vmatpush1.msra.mxu0 0.0
        %1012 = vmatprep.subr.mxu0 0.0
        %1013 = vmatpush1.msra.mxu0 0.0
        %1014 = vmatprep.subr.mxu0 0.0
        %1015 = vmatpush1.msra.mxu0 0.0
        %1016 = vmatprep.subr.mxu0 0.0
        %1017 = vmatpush1.msra.mxu0 0.0
        %1018 = vmatprep.subr.mxu0 0.0
        %1019 = vmatpush1.msra.mxu0 0.0
        %1020 = vmatprep.subr.mxu0 0.0
        %1021 = vmatpush1.msra.mxu0 0.0
        %1022 = vmatprep.mubr.f32.mxu0 0.0
        %1023 = vmatmul.mubr.f32.gmra.mrb[0].mxu0 %v953
        %v1024 = vpop.f32.mrb[0].mxu0
        %v1025 = vadd.f32 0.0, %v1024
        %v1026 = vpop.f32.mrb[0].mxu0
        %1027 = vdwg.mxu0
        %v1029 = vsel %vm615, %v779, 0
        %v1031 = vsel %vm955, %v609, 0
        %1033 = vmatprep.subr.mxu0 0.0
        %1034 = vmatpush1.msra.mxu0 %v1031
        %1035 = vmatprep.subr.mxu0 0.0
        %1036 = vmatpush1.msra.mxu0 0.0
        %1037 = vmatprep.subr.mxu0 0.0
        %1038 = vmatpush1.msra.mxu0 0.0
        %1039 = vmatprep.subr.mxu0 0.0
        %1040 = vmatpush1.msra.mxu0 0.0
        %1041 = vmatprep.subr.mxu0 0.0
        %1042 = vmatpush1.msra.mxu0 0.0
        %1043 = vmatprep.subr.mxu0 0.0
        %1044 = vmatpush1.msra.mxu0 0.0
        %1045 = vmatprep.subr.mxu0 0.0
        %1046 = vmatpush1.msra.mxu0 0.0
        %1047 = vmatprep.subr.mxu0 0.0
        %1048 = vmatpush1.msra.mxu0 0.0
        %1049 = vmatprep.subr.mxu0 0.0
        %1050 = vmatpush1.msra.mxu0 0.0
        %1051 = vmatprep.subr.mxu0 0.0
        %1052 = vmatpush1.msra.mxu0 0.0
        %1053 = vmatprep.subr.mxu0 0.0
        %1054 = vmatpush1.msra.mxu0 0.0
        %1055 = vmatprep.subr.mxu0 0.0
        %1056 = vmatpush1.msra.mxu0 0.0
        %1057 = vmatprep.subr.mxu0 0.0
        %1058 = vmatpush1.msra.mxu0 0.0
        %1059 = vmatprep.subr.mxu0 0.0
        %1060 = vmatpush1.msra.mxu0 0.0
        %1061 = vmatprep.subr.mxu0 0.0
        %1062 = vmatpush1.msra.mxu0 0.0
        %1063 = vmatprep.subr.mxu0 0.0
        %1064 = vmatpush1.msra.mxu0 0.0
        %1065 = vmatprep.subr.mxu0 0.0
        %1066 = vmatpush1.msra.mxu0 0.0
        %1067 = vmatprep.subr.mxu0 0.0
        %1068 = vmatpush1.msra.mxu0 0.0
        %1069 = vmatprep.subr.mxu0 0.0
        %1070 = vmatpush1.msra.mxu0 0.0
        %1071 = vmatprep.subr.mxu0 0.0
        %1072 = vmatpush1.msra.mxu0 0.0
        %1073 = vmatprep.subr.mxu0 0.0
        %1074 = vmatpush1.msra.mxu0 0.0
        %1075 = vmatprep.subr.mxu0 0.0
        %1076 = vmatpush1.msra.mxu0 0.0
        %1077 = vmatprep.subr.mxu0 0.0
        %1078 = vmatpush1.msra.mxu0 0.0
        %1079 = vmatprep.subr.mxu0 0.0
        %1080 = vmatpush1.msra.mxu0 0.0
        %1081 = vmatprep.subr.mxu0 0.0
        %1082 = vmatpush1.msra.mxu0 0.0
        %1083 = vmatprep.subr.mxu0 0.0
        %1084 = vmatpush1.msra.mxu0 0.0
        %1085 = vmatprep.subr.mxu0 0.0
        %1086 = vmatpush1.msra.mxu0 0.0
        %1087 = vmatprep.subr.mxu0 0.0
        %1088 = vmatpush1.msra.mxu0 0.0
        %1089 = vmatprep.subr.mxu0 0.0
        %1090 = vmatpush1.msra.mxu0 0.0
        %1091 = vmatprep.subr.mxu0 0.0
        %1092 = vmatpush1.msra.mxu0 0.0
        %1093 = vmatprep.subr.mxu0 0.0
        %1094 = vmatpush1.msra.mxu0 0.0
        %1095 = vmatprep.subr.mxu0 0.0
        %1096 = vmatpush1.msra.mxu0 0.0
        %1097 = vmatprep.mubr.f32.mxu0 0.0
        %1098 = vmatmul.mubr.f32.gmra.mrb[0].mxu0 %v1029
        %v1099 = vpop.f32.mrb[0].mxu0
        %v1100 = vadd.f32 %v1025, %v1099
        %v1101 = vpop.f32.mrb[0].mxu0
        %1102 = vdwg.mxu0
        %1103 = vrot.lane.b32.xlu0 %v464, 120
        %v1104 = vpop.permute.xlu0 %1103
        %1105 = vrot.lane.b32.xlu0 %v534, 120
        %v1106 = vpop.permute.xlu0 %1105
        %v1107 = vsel %vm615, %v1104, 0
        %v1109 = vsel %vm615, %v1106, 0
        %1111 = vmatprep.subr.mxu0 0.0
        %1112 = vmatpush1.xpose.msra.mxu0 %v1109
        %1113 = vmatprep.subr.mxu0 0.0
        %1114 = vmatpush1.xpose.msra.mxu0 0.0
        %1115 = vmatprep.subr.mxu0 0.0
        %1116 = vmatpush1.xpose.msra.mxu0 0.0
        %1117 = vmatprep.subr.mxu0 0.0
        %1118 = vmatpush1.xpose.msra.mxu0 0.0
        %1119 = vmatprep.subr.mxu0 0.0
        %1120 = vmatpush1.xpose.msra.mxu0 0.0
        %1121 = vmatprep.subr.mxu0 0.0
        %1122 = vmatpush1.xpose.msra.mxu0 0.0
        %1123 = vmatprep.subr.mxu0 0.0
        %1124 = vmatpush1.xpose.msra.mxu0 0.0
        %1125 = vmatprep.subr.mxu0 0.0
        %1126 = vmatpush1.xpose.msra.mxu0 0.0
        %1127 = vmatprep.subr.mxu0 0.0
        %1128 = vmatpush1.xpose.msra.mxu0 0.0
        %1129 = vmatprep.subr.mxu0 0.0
        %1130 = vmatpush1.xpose.msra.mxu0 0.0
        %1131 = vmatprep.subr.mxu0 0.0
        %1132 = vmatpush1.xpose.msra.mxu0 0.0
        %1133 = vmatprep.subr.mxu0 0.0
        %1134 = vmatpush1.xpose.msra.mxu0 0.0
        %1135 = vmatprep.subr.mxu0 0.0
        %1136 = vmatpush1.xpose.msra.mxu0 0.0
        %1137 = vmatprep.subr.mxu0 0.0
        %1138 = vmatpush1.xpose.msra.mxu0 0.0
        %1139 = vmatprep.subr.mxu0 0.0
        %1140 = vmatpush1.xpose.msra.mxu0 0.0
        %1141 = vmatprep.subr.mxu0 0.0
        %1142 = vmatpush1.xpose.msra.mxu0 0.0
        %1143 = vmatprep.subr.mxu0 0.0
        %1144 = vmatpush1.xpose.msra.mxu0 0.0
        %1145 = vmatprep.subr.mxu0 0.0
        %1146 = vmatpush1.xpose.msra.mxu0 0.0
        %1147 = vmatprep.subr.mxu0 0.0
        %1148 = vmatpush1.xpose.msra.mxu0 0.0
        %1149 = vmatprep.subr.mxu0 0.0
        %1150 = vmatpush1.xpose.msra.mxu0 0.0
        %1151 = vmatprep.subr.mxu0 0.0
        %1152 = vmatpush1.xpose.msra.mxu0 0.0
        %1153 = vmatprep.subr.mxu0 0.0
        %1154 = vmatpush1.xpose.msra.mxu0 0.0
        %1155 = vmatprep.subr.mxu0 0.0
        %1156 = vmatpush1.xpose.msra.mxu0 0.0
        %1157 = vmatprep.subr.mxu0 0.0
        %1158 = vmatpush1.xpose.msra.mxu0 0.0
        %1159 = vmatprep.subr.mxu0 0.0
        %1160 = vmatpush1.xpose.msra.mxu0 0.0
        %1161 = vmatprep.subr.mxu0 0.0
        %1162 = vmatpush1.xpose.msra.mxu0 0.0
        %1163 = vmatprep.subr.mxu0 0.0
        %1164 = vmatpush1.xpose.msra.mxu0 0.0
        %1165 = vmatprep.subr.mxu0 0.0
        %1166 = vmatpush1.xpose.msra.mxu0 0.0
        %1167 = vmatprep.subr.mxu0 0.0
        %1168 = vmatpush1.xpose.msra.mxu0 0.0
        %1169 = vmatprep.subr.mxu0 0.0
        %1170 = vmatpush1.xpose.msra.mxu0 0.0
        %1171 = vmatprep.subr.mxu0 0.0
        %1172 = vmatpush1.xpose.msra.mxu0 0.0
        %1173 = vmatprep.subr.mxu0 0.0
        %1174 = vmatpush1.xpose.msra.mxu0 0.0
        %1175 = vmatprep.mubr.f32.mxu0 0.0
        %1176 = vmatmul.mubr.f32.gmra.mrb[0].mxu0 %v1107
        %v1177 = vpop.f32.mrb[0].mxu0
        %v1178 = vadd.f32 0.0, %v1177
        %v1179 = vpop.f32.mrb[0].mxu0
        %1180 = vdwg.mxu0
        %v1181 = vmul.f32 %v1178, %v613
        %s1182 = scalar_lea.vmem %s347, 16 [#allocation4]
        %1183 = vst.msk [vmem:[%s1182] sm:$0xff] %vm693, %v1181
        %v1184 = vmul.f32 %v1181, 0.5
        %v1185 = vsel %vm693, %v1184, -inf
        %1186 = vmax.xlane.f32.xlu0 %v1185
        %v1187 = vpop.xlane.xlu0 %1186
        %v1188 = vsub.f32 %v1184, %v1187
        %v1189 = vmul.f32 %v1188, 1.442695
        %v1190 = vpow.pop %v1189
        %v1191 = vsel %vm693, %v1190, 0.0
        %1192 = vadd.xlane.f32.xlu0 %v1191
        %v1193 = vpop.xlane.xlu0 %1192
        %1194 = vrot.lane.b32.xlu0 %v604, 120
        %v1195 = vpop.permute.xlu0 %1194
        %v1198 = vsel %vm693, %v1190, 0
        %1200 = vmatprep.subr.mxu0 0.0
        %1201 = vmatpush1.msra.mxu0 %v1195
        %1202 = vmatprep.subr.mxu0 0.0
        %1203 = vmatpush1.msra.mxu0 0.0
        %1204 = vmatprep.subr.mxu0 0.0
        %1205 = vmatpush1.msra.mxu0 0.0
        %1206 = vmatprep.subr.mxu0 0.0
        %1207 = vmatpush1.msra.mxu0 0.0
        %1208 = vmatprep.subr.mxu0 0.0
        %1209 = vmatpush1.msra.mxu0 0.0
        %1210 = vmatprep.subr.mxu0 0.0
        %1211 = vmatpush1.msra.mxu0 0.0
        %1212 = vmatprep.subr.mxu0 0.0
        %1213 = vmatpush1.msra.mxu0 0.0
        %1214 = vmatprep.subr.mxu0 0.0
        %1215 = vmatpush1.msra.mxu0 0.0
        %1216 = vmatprep.subr.mxu0 0.0
        %1217 = vmatpush1.msra.mxu0 0.0
        %1218 = vmatprep.subr.mxu0 0.0
        %1219 = vmatpush1.msra.mxu0 0.0
        %1220 = vmatprep.subr.mxu0 0.0
        %1221 = vmatpush1.msra.mxu0 0.0
        %1222 = vmatprep.subr.mxu0 0.0
        %1223 = vmatpush1.msra.mxu0 0.0
        %1224 = vmatprep.subr.mxu0 0.0
        %1225 = vmatpush1.msra.mxu0 0.0
        %1226 = vmatprep.subr.mxu0 0.0
        %1227 = vmatpush1.msra.mxu0 0.0
        %1228 = vmatprep.subr.mxu0 0.0
        %1229 = vmatpush1.msra.mxu0 0.0
        %1230 = vmatprep.subr.mxu0 0.0
        %1231 = vmatpush1.msra.mxu0 0.0
        %1232 = vmatprep.subr.mxu0 0.0
        %1233 = vmatpush1.msra.mxu0 0.0
        %1234 = vmatprep.subr.mxu0 0.0
        %1235 = vmatpush1.msra.mxu0 0.0
        %1236 = vmatprep.subr.mxu0 0.0
        %1237 = vmatpush1.msra.mxu0 0.0
        %1238 = vmatprep.subr.mxu0 0.0
        %1239 = vmatpush1.msra.mxu0 0.0
        %1240 = vmatprep.subr.mxu0 0.0
        %1241 = vmatpush1.msra.mxu0 0.0
        %1242 = vmatprep.subr.mxu0 0.0
        %1243 = vmatpush1.msra.mxu0 0.0
        %1244 = vmatprep.subr.mxu0 0.0
        %1245 = vmatpush1.msra.mxu0 0.0
        %1246 = vmatprep.subr.mxu0 0.0
        %1247 = vmatpush1.msra.mxu0 0.0
        %1248 = vmatprep.subr.mxu0 0.0
        %1249 = vmatpush1.msra.mxu0 0.0
        %1250 = vmatprep.subr.mxu0 0.0
        %1251 = vmatpush1.msra.mxu0 0.0
        %1252 = vmatprep.subr.mxu0 0.0
        %1253 = vmatpush1.msra.mxu0 0.0
        %1254 = vmatprep.subr.mxu0 0.0
        %1255 = vmatpush1.msra.mxu0 0.0
        %1256 = vmatprep.subr.mxu0 0.0
        %1257 = vmatpush1.msra.mxu0 0.0
        %1258 = vmatprep.subr.mxu0 0.0
        %1259 = vmatpush1.msra.mxu0 0.0
        %1260 = vmatprep.subr.mxu0 0.0
        %1261 = vmatpush1.msra.mxu0 0.0
        %1262 = vmatprep.subr.mxu0 0.0
        %1263 = vmatpush1.msra.mxu0 0.0
        %1264 = vmatprep.mubr.f32.mxu0 0.0
        %1265 = vmatmul.mubr.f32.gmra.mrb[0].mxu0 %v1198
        %v1266 = vpop.f32.mrb[0].mxu0
        %v1267 = vadd.f32 0.0, %v1266
        %v1268 = vpop.f32.mrb[0].mxu0
        %1269 = vdwg.mxu0
        %v1270 = vrcp.pop %v1193
        %v1271 = vmul.f32 %v1267, %v1270
        %v1273 = vsel %vm615, %v1271, 0
        %v1276 = vsel %vm955, %v610, 0
        %1278 = vmatprep.subr.mxu0 0.0
        %1279 = vmatpush1.msra.mxu0 %v1276
        %1280 = vmatprep.subr.mxu0 0.0
        %1281 = vmatpush1.msra.mxu0 0.0
        %1282 = vmatprep.subr.mxu0 0.0
        %1283 = vmatpush1.msra.mxu0 0.0
        %1284 = vmatprep.subr.mxu0 0.0
        %1285 = vmatpush1.msra.mxu0 0.0
        %1286 = vmatprep.subr.mxu0 0.0
        %1287 = vmatpush1.msra.mxu0 0.0
        %1288 = vmatprep.subr.mxu0 0.0
        %1289 = vmatpush1.msra.mxu0 0.0
        %1290 = vmatprep.subr.mxu0 0.0
        %1291 = vmatpush1.msra.mxu0 0.0
        %1292 = vmatprep.subr.mxu0 0.0
        %1293 = vmatpush1.msra.mxu0 0.0
        %1294 = vmatprep.subr.mxu0 0.0
        %1295 = vmatpush1.msra.mxu0 0.0
        %1296 = vmatprep.subr.mxu0 0.0
        %1297 = vmatpush1.msra.mxu0 0.0
        %1298 = vmatprep.subr.mxu0 0.0
        %1299 = vmatpush1.msra.mxu0 0.0
        %1300 = vmatprep.subr.mxu0 0.0
        %1301 = vmatpush1.msra.mxu0 0.0
        %1302 = vmatprep.subr.mxu0 0.0
        %1303 = vmatpush1.msra.mxu0 0.0
        %1304 = vmatprep.subr.mxu0 0.0
        %1305 = vmatpush1.msra.mxu0 0.0
        %1306 = vmatprep.subr.mxu0 0.0
        %1307 = vmatpush1.msra.mxu0 0.0
        %1308 = vmatprep.subr.mxu0 0.0
        %1309 = vmatpush1.msra.mxu0 0.0
        %1310 = vmatprep.subr.mxu0 0.0
        %1311 = vmatpush1.msra.mxu0 0.0
        %1312 = vmatprep.subr.mxu0 0.0
        %1313 = vmatpush1.msra.mxu0 0.0
        %1314 = vmatprep.subr.mxu0 0.0
        %1315 = vmatpush1.msra.mxu0 0.0
        %1316 = vmatprep.subr.mxu0 0.0
        %1317 = vmatpush1.msra.mxu0 0.0
        %1318 = vmatprep.subr.mxu0 0.0
        %1319 = vmatpush1.msra.mxu0 0.0
        %1320 = vmatprep.subr.mxu0 0.0
        %1321 = vmatpush1.msra.mxu0 0.0
        %1322 = vmatprep.subr.mxu0 0.0
        %1323 = vmatpush1.msra.mxu0 0.0
        %1324 = vmatprep.subr.mxu0 0.0
        %1325 = vmatpush1.msra.mxu0 0.0
        %1326 = vmatprep.subr.mxu0 0.0
        %1327 = vmatpush1.msra.mxu0 0.0
        %1328 = vmatprep.subr.mxu0 0.0
        %1329 = vmatpush1.msra.mxu0 0.0
        %1330 = vmatprep.subr.mxu0 0.0
        %1331 = vmatpush1.msra.mxu0 0.0
        %1332 = vmatprep.subr.mxu0 0.0
        %1333 = vmatpush1.msra.mxu0 0.0
        %1334 = vmatprep.subr.mxu0 0.0
        %1335 = vmatpush1.msra.mxu0 0.0
        %1336 = vmatprep.subr.mxu0 0.0
        %1337 = vmatpush1.msra.mxu0 0.0
        %1338 = vmatprep.subr.mxu0 0.0
        %1339 = vmatpush1.msra.mxu0 0.0
        %1340 = vmatprep.subr.mxu0 0.0
        %1341 = vmatpush1.msra.mxu0 0.0
        %1342 = vmatprep.mubr.f32.mxu0 0.0
        %1343 = vmatmul.mubr.f32.gmra.mrb[0].mxu0 %v1273
        %v1344 = vpop.f32.mrb[0].mxu0
        %v1345 = vadd.f32 0.0, %v1344
        %v1346 = vpop.f32.mrb[0].mxu0
        %1347 = vdwg.mxu0
        %v1348 = vadd.f32 %v1100, %v1345
        %1349 = vrot.lane.b32.xlu0 %v464, 116
        %v1350 = vpop.permute.xlu0 %1349
        %1351 = vrot.lane.b32.xlu0 %v534, 116
        %v1352 = vpop.permute.xlu0 %1351
        %v1353 = vsel %vm615, %v1350, 0
        %v1355 = vsel %vm615, %v1352, 0
        %1357 = vmatprep.subr.mxu0 0.0
        %1358 = vmatpush1.xpose.msra.mxu0 %v1355
        %1359 = vmatprep.subr.mxu0 0.0
        %1360 = vmatpush1.xpose.msra.mxu0 0.0
        %1361 = vmatprep.subr.mxu0 0.0
        %1362 = vmatpush1.xpose.msra.mxu0 0.0
        %1363 = vmatprep.subr.mxu0 0.0
        %1364 = vmatpush1.xpose.msra.mxu0 0.0
        %1365 = vmatprep.subr.mxu0 0.0
        %1366 = vmatpush1.xpose.msra.mxu0 0.0
        %1367 = vmatprep.subr.mxu0 0.0
        %1368 = vmatpush1.xpose.msra.mxu0 0.0
        %1369 = vmatprep.subr.mxu0 0.0
        %1370 = vmatpush1.xpose.msra.mxu0 0.0
        %1371 = vmatprep.subr.mxu0 0.0
        %1372 = vmatpush1.xpose.msra.mxu0 0.0
        %1373 = vmatprep.subr.mxu0 0.0
        %1374 = vmatpush1.xpose.msra.mxu0 0.0
        %1375 = vmatprep.subr.mxu0 0.0
        %1376 = vmatpush1.xpose.msra.mxu0 0.0
        %1377 = vmatprep.subr.mxu0 0.0
        %1378 = vmatpush1.xpose.msra.mxu0 0.0
        %1379 = vmatprep.subr.mxu0 0.0
        %1380 = vmatpush1.xpose.msra.mxu0 0.0
        %1381 = vmatprep.subr.mxu0 0.0
        %1382 = vmatpush1.xpose.msra.mxu0 0.0
        %1383 = vmatprep.subr.mxu0 0.0
        %1384 = vmatpush1.xpose.msra.mxu0 0.0
        %1385 = vmatprep.subr.mxu0 0.0
        %1386 = vmatpush1.xpose.msra.mxu0 0.0
        %1387 = vmatprep.subr.mxu0 0.0
        %1388 = vmatpush1.xpose.msra.mxu0 0.0
        %1389 = vmatprep.subr.mxu0 0.0
        %1390 = vmatpush1.xpose.msra.mxu0 0.0
        %1391 = vmatprep.subr.mxu0 0.0
        %1392 = vmatpush1.xpose.msra.mxu0 0.0
        %1393 = vmatprep.subr.mxu0 0.0
        %1394 = vmatpush1.xpose.msra.mxu0 0.0
        %1395 = vmatprep.subr.mxu0 0.0
        %1396 = vmatpush1.xpose.msra.mxu0 0.0
        %1397 = vmatprep.subr.mxu0 0.0
        %1398 = vmatpush1.xpose.msra.mxu0 0.0
        %1399 = vmatprep.subr.mxu0 0.0
        %1400 = vmatpush1.xpose.msra.mxu0 0.0
        %1401 = vmatprep.subr.mxu0 0.0
        %1402 = vmatpush1.xpose.msra.mxu0 0.0
        %1403 = vmatprep.subr.mxu0 0.0
        %1404 = vmatpush1.xpose.msra.mxu0 0.0
        %1405 = vmatprep.subr.mxu0 0.0
        %1406 = vmatpush1.xpose.msra.mxu0 0.0
        %1407 = vmatprep.subr.mxu0 0.0
        %1408 = vmatpush1.xpose.msra.mxu0 0.0
        %1409 = vmatprep.subr.mxu0 0.0
        %1410 = vmatpush1.xpose.msra.mxu0 0.0
        %1411 = vmatprep.subr.mxu0 0.0
        %1412 = vmatpush1.xpose.msra.mxu0 0.0
        %1413 = vmatprep.subr.mxu0 0.0
        %1414 = vmatpush1.xpose.msra.mxu0 0.0
        %1415 = vmatprep.subr.mxu0 0.0
        %1416 = vmatpush1.xpose.msra.mxu0 0.0
        %1417 = vmatprep.subr.mxu0 0.0
        %1418 = vmatpush1.xpose.msra.mxu0 0.0
        %1419 = vmatprep.subr.mxu0 0.0
        %1420 = vmatpush1.xpose.msra.mxu0 0.0
        %1421 = vmatprep.mubr.f32.mxu0 0.0
        %1422 = vmatmul.mubr.f32.gmra.mrb[0].mxu0 %v1353
        %v1423 = vpop.f32.mrb[0].mxu0
        %v1424 = vadd.f32 0.0, %v1423
        %v1425 = vpop.f32.mrb[0].mxu0
        %1426 = vdwg.mxu0
        %v1427 = vmul.f32 %v1424, %v614
        %s1428 = scalar_lea.vmem %s347, 24 [#allocation4]
        %1429 = vst.msk [vmem:[%s1428] sm:$0xff] %vm693, %v1427
        %v1430 = vmul.f32 %v1427, 0.5
        %v1431 = vsel %vm693, %v1430, -inf
        %1432 = vmax.xlane.f32.xlu0 %v1431
        %v1433 = vpop.xlane.xlu0 %1432
        %v1434 = vsub.f32 %v1430, %v1433
        %v1435 = vmul.f32 %v1434, 1.442695
        %v1436 = vpow.pop %v1435
        %v1437 = vsel %vm693, %v1436, 0.0
        %1438 = vadd.xlane.f32.xlu0 %v1437
        %v1439 = vpop.xlane.xlu0 %1438
        %1440 = vrot.lane.b32.xlu0 %v604, 116
        %v1441 = vpop.permute.xlu0 %1440
        %v1444 = vsel %vm693, %v1436, 0
        %1446 = vmatprep.subr.mxu0 0.0
        %1447 = vmatpush1.msra.mxu0 %v1441
        %1448 = vmatprep.subr.mxu0 0.0
        %1449 = vmatpush1.msra.mxu0 0.0
        %1450 = vmatprep.subr.mxu0 0.0
        %1451 = vmatpush1.msra.mxu0 0.0
        %1452 = vmatprep.subr.mxu0 0.0
        %1453 = vmatpush1.msra.mxu0 0.0
        %1454 = vmatprep.subr.mxu0 0.0
        %1455 = vmatpush1.msra.mxu0 0.0
        %1456 = vmatprep.subr.mxu0 0.0
        %1457 = vmatpush1.msra.mxu0 0.0
        %1458 = vmatprep.subr.mxu0 0.0
        %1459 = vmatpush1.msra.mxu0 0.0
        %1460 = vmatprep.subr.mxu0 0.0
        %1461 = vmatpush1.msra.mxu0 0.0
        %1462 = vmatprep.subr.mxu0 0.0
        %1463 = vmatpush1.msra.mxu0 0.0
        %1464 = vmatprep.subr.mxu0 0.0
        %1465 = vmatpush1.msra.mxu0 0.0
        %1466 = vmatprep.subr.mxu0 0.0
        %1467 = vmatpush1.msra.mxu0 0.0
        %1468 = vmatprep.subr.mxu0 0.0
        %1469 = vmatpush1.msra.mxu0 0.0
        %1470 = vmatprep.subr.mxu0 0.0
        %1471 = vmatpush1.msra.mxu0 0.0
        %1472 = vmatprep.subr.mxu0 0.0
        %1473 = vmatpush1.msra.mxu0 0.0
        %1474 = vmatprep.subr.mxu0 0.0
        %1475 = vmatpush1.msra.mxu0 0.0
        %1476 = vmatprep.subr.mxu0 0.0
        %1477 = vmatpush1.msra.mxu0 0.0
        %1478 = vmatprep.subr.mxu0 0.0
        %1479 = vmatpush1.msra.mxu0 0.0
        %1480 = vmatprep.subr.mxu0 0.0
        %1481 = vmatpush1.msra.mxu0 0.0
        %1482 = vmatprep.subr.mxu0 0.0
        %1483 = vmatpush1.msra.mxu0 0.0
        %1484 = vmatprep.subr.mxu0 0.0
        %1485 = vmatpush1.msra.mxu0 0.0
        %1486 = vmatprep.subr.mxu0 0.0
        %1487 = vmatpush1.msra.mxu0 0.0
        %1488 = vmatprep.subr.mxu0 0.0
        %1489 = vmatpush1.msra.mxu0 0.0
        %1490 = vmatprep.subr.mxu0 0.0
        %1491 = vmatpush1.msra.mxu0 0.0
        %1492 = vmatprep.subr.mxu0 0.0
        %1493 = vmatpush1.msra.mxu0 0.0
        %1494 = vmatprep.subr.mxu0 0.0
        %1495 = vmatpush1.msra.mxu0 0.0
        %1496 = vmatprep.subr.mxu0 0.0
        %1497 = vmatpush1.msra.mxu0 0.0
        %1498 = vmatprep.subr.mxu0 0.0
        %1499 = vmatpush1.msra.mxu0 0.0
        %1500 = vmatprep.subr.mxu0 0.0
        %1501 = vmatpush1.msra.mxu0 0.0
        %1502 = vmatprep.subr.mxu0 0.0
        %1503 = vmatpush1.msra.mxu0 0.0
        %1504 = vmatprep.subr.mxu0 0.0
        %1505 = vmatpush1.msra.mxu0 0.0
        %1506 = vmatprep.subr.mxu0 0.0
        %1507 = vmatpush1.msra.mxu0 0.0
        %1508 = vmatprep.subr.mxu0 0.0
        %1509 = vmatpush1.msra.mxu0 0.0
        %1510 = vmatprep.mubr.f32.mxu0 0.0
        %1511 = vmatmul.mubr.f32.gmra.mrb[0].mxu0 %v1444
        %v1512 = vpop.f32.mrb[0].mxu0
        %v1513 = vadd.f32 0.0, %v1512
        %v1514 = vpop.f32.mrb[0].mxu0
        %1515 = vdwg.mxu0
        %v1516 = vrcp.pop %v1439
        %v1517 = vmul.f32 %v1513, %v1516
        %v1518 = vrot.slane %v610, 4
        %v1520 = vsel %vm615, %v1517, 0
        %v1522 = vsel %vm955, %v1518, 0
        %1524 = vmatprep.subr.mxu0 0.0
        %1525 = vmatpush1.msra.mxu0 %v1522
        %1526 = vmatprep.subr.mxu0 0.0
        %1527 = vmatpush1.msra.mxu0 0.0
        %1528 = vmatprep.subr.mxu0 0.0
        %1529 = vmatpush1.msra.mxu0 0.0
        %1530 = vmatprep.subr.mxu0 0.0
        %1531 = vmatpush1.msra.mxu0 0.0
        %1532 = vmatprep.subr.mxu0 0.0
        %1533 = vmatpush1.msra.mxu0 0.0
        %1534 = vmatprep.subr.mxu0 0.0
        %1535 = vmatpush1.msra.mxu0 0.0
        %1536 = vmatprep.subr.mxu0 0.0
        %1537 = vmatpush1.msra.mxu0 0.0
        %1538 = vmatprep.subr.mxu0 0.0
        %1539 = vmatpush1.msra.mxu0 0.0
        %1540 = vmatprep.subr.mxu0 0.0
        %1541 = vmatpush1.msra.mxu0 0.0
        %1542 = vmatprep.subr.mxu0 0.0
        %1543 = vmatpush1.msra.mxu0 0.0
        %1544 = vmatprep.subr.mxu0 0.0
        %1545 = vmatpush1.msra.mxu0 0.0
        %1546 = vmatprep.subr.mxu0 0.0
        %1547 = vmatpush1.msra.mxu0 0.0
        %1548 = vmatprep.subr.mxu0 0.0
        %1549 = vmatpush1.msra.mxu0 0.0
        %1550 = vmatprep.subr.mxu0 0.0
        %1551 = vmatpush1.msra.mxu0 0.0
        %1552 = vmatprep.subr.mxu0 0.0
        %1553 = vmatpush1.msra.mxu0 0.0
        %1554 = vmatprep.subr.mxu0 0.0
        %1555 = vmatpush1.msra.mxu0 0.0
        %1556 = vmatprep.subr.mxu0 0.0
        %1557 = vmatpush1.msra.mxu0 0.0
        %1558 = vmatprep.subr.mxu0 0.0
        %1559 = vmatpush1.msra.mxu0 0.0
        %1560 = vmatprep.subr.mxu0 0.0
        %1561 = vmatpush1.msra.mxu0 0.0
        %1562 = vmatprep.subr.mxu0 0.0
        %1563 = vmatpush1.msra.mxu0 0.0
        %1564 = vmatprep.subr.mxu0 0.0
        %1565 = vmatpush1.msra.mxu0 0.0
        %1566 = vmatprep.subr.mxu0 0.0
        %1567 = vmatpush1.msra.mxu0 0.0
        %1568 = vmatprep.subr.mxu0 0.0
        %1569 = vmatpush1.msra.mxu0 0.0
        %1570 = vmatprep.subr.mxu0 0.0
        %1571 = vmatpush1.msra.mxu0 0.0
        %1572 = vmatprep.subr.mxu0 0.0
        %1573 = vmatpush1.msra.mxu0 0.0
        %1574 = vmatprep.subr.mxu0 0.0
        %1575 = vmatpush1.msra.mxu0 0.0
        %1576 = vmatprep.subr.mxu0 0.0
        %1577 = vmatpush1.msra.mxu0 0.0
        %1578 = vmatprep.subr.mxu0 0.0
        %1579 = vmatpush1.msra.mxu0 0.0
        %1580 = vmatprep.subr.mxu0 0.0
        %1581 = vmatpush1.msra.mxu0 0.0
        %1582 = vmatprep.subr.mxu0 0.0
        %1583 = vmatpush1.msra.mxu0 0.0
        %1584 = vmatprep.subr.mxu0 0.0
        %1585 = vmatpush1.msra.mxu0 0.0
        %1586 = vmatprep.subr.mxu0 0.0
        %1587 = vmatpush1.msra.mxu0 0.0
        %1588 = vmatprep.mubr.f32.mxu0 0.0
        %1589 = vmatmul.mubr.f32.gmra.mrb[0].mxu0 %v1520
        %v1590 = vpop.f32.mrb[0].mxu0
        %v1591 = vadd.f32 0.0, %v1590
        %v1592 = vpop.f32.mrb[0].mxu0
        %1593 = vdwg.mxu0
        %v1594 = vadd.f32 %v1348, %v1591
        %v1595 = vld [vmem:[%s340] sm:$0xff]
        %v1596 = vadd.f32 %v1595, %v1594
        %1597 = vst.msk [vmem:[%s340] sm:$0xff] %vm393, %v1596
        %s1598 = sand.u32 %s205, 1
        %s1599 = scalar_lea.sflag [#allocation3], %s1598
        %s1600 = sand.u32 %s205, 1
        %s1601 = smul.addr %s1600, 8
        %s1602 = scalar_lea.vmem [#allocation2], %s1601
        %s1603 = sand.u32 %s233, 1
        %s1604 = scalar_lea.sflag [#allocation5], %s1603
        %s1605 = sand.u32 %s233, 1
        %s1606 = smul.addr %s1605, 32
        %s1607 = scalar_lea.vmem [#allocation4], %s1606
        // Predicated region
        $region53: #{tpu_custom_call.1} parent=47 // pred_check
          %p1608 = pneg %p215
        $region54: #{tpu_custom_call.1} parent=47 // pred_check_branch
          %1610 = sbr.rel (%p1608) target = $region56
        $region55: #{tpu_custom_call.1} parent=47 // pred_region
          %s1612 = ssub.s32 128, 128
          %1613 = vsyncadd %s1599, %s1612
          %s1614 = smul.addr %s30, 128
          %s1615 = scalar_lea.hbm %s7, %s1614
          %s1617 = sshll.u32 %s1602, 4
          %s1618 = int_to_ptr.vmem [resolvable:$true] %s1617
          %1620 = dma.vmem_to_hbm [thread:$0]  %s1618, 128, %s1615, %s1599
        $region56: #{tpu_custom_call.1} parent=47 // pred_fallthru
          _
        // Predicated region
        $region57: #{tpu_custom_call.1} parent=47 // pred_check
          %p1621 = pneg %p243
        $region58: #{tpu_custom_call.1} parent=47 // pred_check_branch
          %1623 = sbr.rel (%p1621) target = $region60
        $region59: #{tpu_custom_call.1} parent=47 // pred_region
          %s1624 = smul.u32 4, %s31
          %s1626 = ssub.s32 512, 512
          %1627 = vsyncadd %s1604, %s1626
          %s1628 = smul.addr %s30, 8
          %s1629 = sadd.s32 %s1624, %s1628
          %s1630 = smul.addr %s1629, 128
          %s1631 = scalar_lea.hbm %s8, %s1630
          %s1632 = sshll.u32 %s1607, 4
          %s1633 = int_to_ptr.vmem [resolvable:$true] %s1632
          %1638 = dma.vmem_to_hbm [thread:$0]  %s1633, 512, %s1631, %s1604, 128, 128, 8
        $region60: #{tpu_custom_call.1} parent=47 // pred_fallthru
          _
      $region48: #{tpu_custom_call.1} parent=5 // pred_fallthru
        _
      %p1639 = scmp.le.s32.totalorder 2, %s21
      // Predicated region
      $region61: #{tpu_custom_call.1} parent=5 // pred_check
        %p1640 = pneg %p1639
      $region62: #{tpu_custom_call.1} parent=5 // pred_check_branch
        %1642 = sbr.rel (%p1640) target = $region64
      $region63: #{tpu_custom_call.1} parent=5 // pred_region
        %s1643 = ssub.s32 %s21, 2
        // Predicated region
        $region65: #{tpu_custom_call.1} parent=63 // pred_check
          %p1644 = pneg %p221
        $region66: #{tpu_custom_call.1} parent=63 // pred_check_branch
          %1646 = sbr.rel (%p1644) target = $region68
        $region67: #{tpu_custom_call.1} parent=63 // pred_region
          %s1647 = sand.u32 %s206, 1
          %s1648 = scalar_lea.sflag [#allocation3], %s1647
          %s1649 = sand.u32 %s206, 1
          %s1650 = smul.addr %s1649, 8
          %s1651 = scalar_lea.vmem [#allocation2], %s1650
          %1652 = dma.done %s1648, 128
        $region68: #{tpu_custom_call.1} parent=63 // pred_fallthru
          _
        // Predicated region
        $region69: #{tpu_custom_call.1} parent=63 // pred_check
          %p1653 = pneg %p249
        $region70: #{tpu_custom_call.1} parent=63 // pred_check_branch
          %1655 = sbr.rel (%p1653) target = $region72
        $region71: #{tpu_custom_call.1} parent=63 // pred_region
          %s1656 = sand.u32 %s234, 1
          %s1657 = scalar_lea.sflag [#allocation5], %s1656
          %s1658 = sand.u32 %s234, 1
          %s1659 = smul.addr %s1658, 32
          %s1660 = scalar_lea.vmem [#allocation4], %s1659
          %1661 = dma.done %s1657, 512
        $region72: #{tpu_custom_call.1} parent=63 // pred_fallthru
          _
      $region64: #{tpu_custom_call.1} parent=5 // pred_fallthru
        _
    $region6: #{tpu_custom_call.1} parent=1 // loop_footer
      %s25 = sadd.s32 1, %s21
    $region7: #{tpu_custom_call.1} parent=1 // loop_footer_branch
      %20 = sbr.rel target = $region3
    $region8: #{tpu_custom_call.1} parent=1 // loop_exit
      _
    %1662 = vsyncpa [#allocation3], 1
    %s1663 = scalar_lea.sflag [#allocation3], 1
    %1664 = vsyncpa %s1663, 1
    %1665 = vsyncpa [#allocation5], 1
    %s1666 = scalar_lea.sflag [#allocation5], 1
    %1667 = vsyncpa %s1666, 1

</llo_original>
